<compile_context>
chip_gen: v6e
topology: v6e:2x2x1
jax: 0.10.0
libtpu: 0.0.40
codegen_flags: <defaults>
</compile_context>

<pallas_src>
import functools

import jax
import jax.numpy as jnp
from jax.experimental import pallas as pl
from jax.experimental.pallas import tpu as pltpu


def _round_up(x, m):
    return (x + m - 1) // m * m


def _plan_tiling(N, C, H, W, OH, OW, itemsize):
    """Pick the channel tile and vmem limit from the chip's actual VMEM capacity."""
    try:
        cap = int(pltpu.get_tpu_info().vmem_capacity_bytes)
    except Exception:
        cap = 64 << 20  # conservative default that fits every TPU generation

    # Double-buffered (pipelined) input + output block bytes per channel, including
    # (8, 128) tile padding of the trailing two dims.
    per_c_in = _round_up(H, 8) * _round_up(W, 128) * itemsize
    per_c_out = _round_up(OH, 8) * _round_up(OW, 128) * itemsize
    per_c = 2 * (per_c_in + per_c_out)

    budget = (cap * 3) // 8  # ~48 MiB on 128 MiB chips, ~24 MiB on v7x (64 MiB)
    divisors = [d for d in range(1, C + 1) if C % d == 0]
    fitting = [d for d in divisors if d * per_c <= budget]
    tc = max(fitting) if fitting else 1

    # Guarantee >= 2 parallel grid steps when possible (both v7x TensorCores get work).
    if N * (C // tc) < 2:
        smaller = [d for d in fitting if C // d >= 2]
        if smaller:
            tc = max(smaller)

    working = tc * per_c
    vmem_limit = max(working + (8 << 20), 32 << 20)
    vmem_limit = min(vmem_limit, (cap * 3) // 4)
    vmem_limit = max(vmem_limit, working + (2 << 20))  # never starve the pipeline
    return tc, int(vmem_limit)


def _avg_agg_kernel(x_ref, o_ref, *, kh, kw, dil, stride):
    # x_ref: (TC, H, W)  -- W on the 128-lane axis, H on sublanes, TC outer.
    # o_ref: (TC, OH, OW)
    _, _, W = x_ref.shape
    _, OH, OW = o_ref.shape
    scale = 1.0 / float(kh * kw)

    # Banded W-aggregation matrix: a_w[w, ow] = scale iff w == ow*stride + j*dil for
    # some tap j < kw.  Folds the kw W-taps, the W stride/dilation subsampling and the
    # 1/(kh*kw) mean scaling into a single matmul per output row on the idle MXU.
    w_iota = jax.lax.broadcasted_iota(jnp.int32, (W, OW), 0)
    ow_iota = jax.lax.broadcasted_iota(jnp.int32, (W, OW), 1)
    a_w = jnp.zeros((W, OW), jnp.float32)
    for j in range(kw):
        a_w = a_w + (w_iota == ow_iota * stride + j * dil).astype(jnp.float32)
    a_w = a_w * scale

    # Static loop over output rows: sum the kh H-taps in registers (store-once, no
    # VMEM scratch RMW), then one matmul + one store per output row.
    for oh_i in range(OH):
        h0 = oh_i * stride
        row = x_ref[:, h0, :].astype(jnp.float32)                      # (TC, W)
        for i in range(1, kh):
            row = row + x_ref[:, h0 + i * dil, :].astype(jnp.float32)
        out_row = jnp.dot(row, a_w, preferred_element_type=jnp.float32)  # (TC, OW)
        o_ref[:, oh_i, :] = out_row.astype(o_ref.dtype)


def avg_feat_agg2d(x, kernel_size, output_size, dilation=1, stride=1):
    """x: (N, C, H, W) -> (N, C, OH*OW). Mirrors AvgFeatAGG2d.forward (NCHW in/out)."""
    N, C, H, W = x.shape
    kh, kw = int(kernel_size[0]), int(kernel_size[1])
    oh, ow = int(output_size[0]), int(output_size[1])
    # unfold output spatial extent must match the declared output_size
    assert oh == (H - dilation * (kh - 1) - 1) // stride + 1
    assert ow == (W - dilation * (kw - 1) - 1) // stride + 1

    tc, vmem_limit = _plan_tiling(N, C, H, W, oh, ow, x.dtype.itemsize)

    kernel = functools.partial(
        _avg_agg_kernel, kh=kh, kw=kw, dil=dilation, stride=stride)

    # Full-extent (H, W) block keeps the (8,128) full-dim exemption; trimming to the
    # exact read span only helps when stride leaves an unread remainder (rare).
    out4 = pl.pallas_call(
        kernel,
        out_shape=jax.ShapeDtypeStruct((N, C, oh, ow), x.dtype),
        grid_spec=pltpu.PrefetchScalarGridSpec(
            num_scalar_prefetch=0,
            grid=(N, C // tc),
            in_specs=[pl.BlockSpec((None, tc, H, W), lambda n, c: (n, c, 0, 0))],
            out_specs=pl.BlockSpec((None, tc, oh, ow), lambda n, c: (n, c, 0, 0)),
        ),
        compiler_params=pltpu.CompilerParams(
            dimension_semantics=("parallel", "parallel"),
            vmem_limit_bytes=vmem_limit,
        ),
    )(x)

    # Only a trailing-dim merge; no NCHW<->NHWC relayout anywhere in the op.
    return out4.reshape(N, C, oh * ow)


def _reference(x, kernel_size, output_size, dilation=1, stride=1):
    # Pure-JAX reference of unfold + reshape + mean(dim=2)
    N, C, H, W = x.shape
    kh, kw = kernel_size
    oh, ow = output_size
    taps = []
    for i in range(kh):
        for j in range(kw):
            hs, ws = i * dilation, j * dilation
            taps.append(
                x[:, :, hs: hs + (oh - 1) * stride + 1: stride,
                        ws: ws + (ow - 1) * stride + 1: stride])
    stacked = jnp.stack(taps, axis=2)  # (N, C, kh*kw, oh, ow)
    return jnp.mean(stacked, axis=2).reshape(N, C, oh * ow)


def _run_case(key, N, C, H, W, ksize, dilation, stride):
    kh, kw = ksize
    oh = (H - dilation * (kh - 1) - 1) // stride + 1
    ow = (W - dilation * (kw - 1) - 1) // stride + 1
    x = jax.random.normal(key, (N, C, H, W), dtype=jnp.float32)
    out = avg_feat_agg2d(x, ksize, (oh, ow), dilation=dilation, stride=stride)
    out = jax.block_until_ready(out)
    ref = _reference(x, ksize, (oh, ow), dilation=dilation, stride=stride)
    assert out.shape == (N, C, oh * ow), out.shape
    err = float(jnp.max(jnp.abs(out - ref)))
    assert jnp.allclose(out, ref, atol=1e-5, rtol=1e-5), err


if __name__ == "__main__":
    key = jax.random.PRNGKey(0)
    k0, k1, k2 = jax.random.split(key, 3)
    # Base case (module's typical use): 4x4 window, stride 1, dilation 1.
    _run_case(k0, N=2, C=4, H=16, W=16, ksize=(4, 4), dilation=1, stride=1)
    # stride > 1 and dilation > 1 paths (review correctness concern).
    _run_case(k1, N=2, C=4, H=16, W=16, ksize=(3, 3), dilation=1, stride=2)
    _run_case(k2, N=1, C=8, H=16, W=16, ksize=(3, 3), dilation=2, stride=1)
    print("KERNEL_OK")
</pallas_src>

<mosaic_0001>
module attributes {stable_mosaic.version = 11 : i64} {
  func.func @_avg_agg_kernel(%arg0: i32, %arg1: i32, %arg2: memref<1x4x16x16xf32, #tpu.memory_space<vmem>>, %arg3: memref<1x4x13x13xf32, #tpu.memory_space<vmem>>) attributes {dimension_semantics = [#tpu.dimension_semantics<parallel>, #tpu.dimension_semantics<parallel>], iteration_bounds = array<i64: 2, 1>, scalar_prefetch = 0 : i64, scratch_operands = 0 : i64, tpu.core_type = #tpu.core_type<tc>, window_params = [{transform_indices = @transform_0, window_bounds = array<i64: 1, 4, 16, 16>}, {transform_indices = @transform_1, window_bounds = array<i64: 1, 4, 13, 13>}]} {
    %0 = tpu.iota {dimensions = array<i32: 0>} : vector<16x13xi32>
    %1 = tpu.iota {dimensions = array<i32: 1>} : vector<16x13xi32>
    %cst = arith.constant 0.000000e+00 : f32
    %2 = vector.broadcast %cst : f32 to vector<16x13xf32>
    %c1_i32 = arith.constant 1 : i32
    %3 = vector.broadcast %c1_i32 : i32 to vector<16x13xi32>
    %4 = arith.muli %1, %3 : vector<16x13xi32>
    %c0_i32 = arith.constant 0 : i32
    %5 = vector.broadcast %c0_i32 : i32 to vector<16x13xi32>
    %6 = arith.addi %4, %5 : vector<16x13xi32>
    %7 = arith.cmpi eq, %0, %6 : vector<16x13xi32>
    %8 = arith.extui %7 : vector<16x13xi1> to vector<16x13xi32>
    %9 = arith.sitofp %8 : vector<16x13xi32> to vector<16x13xf32>
    %10 = arith.addf %2, %9 : vector<16x13xf32>
    %c1_i32_0 = arith.constant 1 : i32
    %11 = vector.broadcast %c1_i32_0 : i32 to vector<16x13xi32>
    %12 = arith.muli %1, %11 : vector<16x13xi32>
    %c1_i32_1 = arith.constant 1 : i32
    %13 = vector.broadcast %c1_i32_1 : i32 to vector<16x13xi32>
    %14 = arith.addi %12, %13 : vector<16x13xi32>
    %15 = arith.cmpi eq, %0, %14 : vector<16x13xi32>
    %16 = arith.extui %15 : vector<16x13xi1> to vector<16x13xi32>
    %17 = arith.sitofp %16 : vector<16x13xi32> to vector<16x13xf32>
    %18 = arith.addf %10, %17 : vector<16x13xf32>
    %c1_i32_2 = arith.constant 1 : i32
    %19 = vector.broadcast %c1_i32_2 : i32 to vector<16x13xi32>
    %20 = arith.muli %1, %19 : vector<16x13xi32>
    %c2_i32 = arith.constant 2 : i32
    %21 = vector.broadcast %c2_i32 : i32 to vector<16x13xi32>
    %22 = arith.addi %20, %21 : vector<16x13xi32>
    %23 = arith.cmpi eq, %0, %22 : vector<16x13xi32>
    %24 = arith.extui %23 : vector<16x13xi1> to vector<16x13xi32>
    %25 = arith.sitofp %24 : vector<16x13xi32> to vector<16x13xf32>
    %26 = arith.addf %18, %25 : vector<16x13xf32>
    %c1_i32_3 = arith.constant 1 : i32
    %27 = vector.broadcast %c1_i32_3 : i32 to vector<16x13xi32>
    %28 = arith.muli %1, %27 : vector<16x13xi32>
    %c3_i32 = arith.constant 3 : i32
    %29 = vector.broadcast %c3_i32 : i32 to vector<16x13xi32>
    %30 = arith.addi %28, %29 : vector<16x13xi32>
    %31 = arith.cmpi eq, %0, %30 : vector<16x13xi32>
    %32 = arith.extui %31 : vector<16x13xi1> to vector<16x13xi32>
    %33 = arith.sitofp %32 : vector<16x13xi32> to vector<16x13xf32>
    %34 = arith.addf %26, %33 : vector<16x13xf32>
    %cst_4 = arith.constant 6.250000e-02 : f32
    %35 = vector.broadcast %cst_4 : f32 to vector<16x13xf32>
    %36 = arith.mulf %34, %35 : vector<16x13xf32>
    %c0 = arith.constant 0 : index
    %c0_5 = arith.constant 0 : index
    %c0_6 = arith.constant 0 : index
    %c0_7 = arith.constant 0 : index
    %37 = vector.load %arg2[%c0, %c0_5, %c0_6, %c0_7] : memref<1x4x16x16xf32, #tpu.memory_space<vmem>>, vector<1x4x1x16xf32>
    %38 = vector.shape_cast %37 : vector<1x4x1x16xf32> to vector<4x16xf32>
    %c0_8 = arith.constant 0 : index
    %c0_9 = arith.constant 0 : index
    %c1 = arith.constant 1 : index
    %c0_10 = arith.constant 0 : index
    %39 = vector.load %arg2[%c0_8, %c0_9, %c1, %c0_10] : memref<1x4x16x16xf32, #tpu.memory_space<vmem>>, vector<1x4x1x16xf32>
    %40 = vector.shape_cast %39 : vector<1x4x1x16xf32> to vector<4x16xf32>
    %41 = arith.addf %38, %40 : vector<4x16xf32>
    %c0_11 = arith.constant 0 : index
    %c0_12 = arith.constant 0 : index
    %c2 = arith.constant 2 : index
    %c0_13 = arith.constant 0 : index
    %42 = vector.load %arg2[%c0_11, %c0_12, %c2, %c0_13] : memref<1x4x16x16xf32, #tpu.memory_space<vmem>>, vector<1x4x1x16xf32>
    %43 = vector.shape_cast %42 : vector<1x4x1x16xf32> to vector<4x16xf32>
    %44 = arith.addf %41, %43 : vector<4x16xf32>
    %c0_14 = arith.constant 0 : index
    %c0_15 = arith.constant 0 : index
    %c3 = arith.constant 3 : index
    %c0_16 = arith.constant 0 : index
    %45 = vector.load %arg2[%c0_14, %c0_15, %c3, %c0_16] : memref<1x4x16x16xf32, #tpu.memory_space<vmem>>, vector<1x4x1x16xf32>
    %46 = vector.shape_cast %45 : vector<1x4x1x16xf32> to vector<4x16xf32>
    %47 = arith.addf %44, %46 : vector<4x16xf32>
    %cst_17 = arith.constant dense<0.000000e+00> : vector<4x13xf32>
    %48 = tpu.matmul %47, %36, %cst_17 {dimension_numbers = #tpu.dot_dimension_numbers<[1], [0], [0], [1], [0, 0, 1, 1], [], []>} : vector<4x16xf32>, vector<16x13xf32>, vector<4x13xf32> -> vector<4x13xf32>
    %c0_18 = arith.constant 0 : index
    %c0_19 = arith.constant 0 : index
    %c0_20 = arith.constant 0 : index
    %c0_21 = arith.constant 0 : index
    %49 = vector.load %arg3[%c0_18, %c0_19, %c0_20, %c0_21] : memref<1x4x13x13xf32, #tpu.memory_space<vmem>>, vector<1x4x1x13xf32>
    %50 = vector.shape_cast %49 : vector<1x4x1x13xf32> to vector<4x13xf32>
    %51 = vector.shape_cast %48 : vector<4x13xf32> to vector<1x4x1x13xf32>
    tpu.vector_store %arg3[%c0_18, %c0_19, %c0_20, %c0_21], %51 {strides = array<i32>} : memref<1x4x13x13xf32, #tpu.memory_space<vmem>>, vector<1x4x1x13xf32>,
    %c0_22 = arith.constant 0 : index
    %c0_23 = arith.constant 0 : index
    %c1_24 = arith.constant 1 : index
    %c0_25 = arith.constant 0 : index
    %52 = vector.load %arg2[%c0_22, %c0_23, %c1_24, %c0_25] : memref<1x4x16x16xf32, #tpu.memory_space<vmem>>, vector<1x4x1x16xf32>
    %53 = vector.shape_cast %52 : vector<1x4x1x16xf32> to vector<4x16xf32>
    %c0_26 = arith.constant 0 : index
    %c0_27 = arith.constant 0 : index
    %c2_28 = arith.constant 2 : index
    %c0_29 = arith.constant 0 : index
    %54 = vector.load %arg2[%c0_26, %c0_27, %c2_28, %c0_29] : memref<1x4x16x16xf32, #tpu.memory_space<vmem>>, vector<1x4x1x16xf32>
    %55 = vector.shape_cast %54 : vector<1x4x1x16xf32> to vector<4x16xf32>
    %56 = arith.addf %53, %55 : vector<4x16xf32>
    %c0_30 = arith.constant 0 : index
    %c0_31 = arith.constant 0 : index
    %c3_32 = arith.constant 3 : index
    %c0_33 = arith.constant 0 : index
    %57 = vector.load %arg2[%c0_30, %c0_31, %c3_32, %c0_33] : memref<1x4x16x16xf32, #tpu.memory_space<vmem>>, vector<1x4x1x16xf32>
    %58 = vector.shape_cast %57 : vector<1x4x1x16xf32> to vector<4x16xf32>
    %59 = arith.addf %56, %58 : vector<4x16xf32>
    %c0_34 = arith.constant 0 : index
    %c0_35 = arith.constant 0 : index
    %c4 = arith.constant 4 : index
    %c0_36 = arith.constant 0 : index
    %60 = vector.load %arg2[%c0_34, %c0_35, %c4, %c0_36] : memref<1x4x16x16xf32, #tpu.memory_space<vmem>>, vector<1x4x1x16xf32>
    %61 = vector.shape_cast %60 : vector<1x4x1x16xf32> to vector<4x16xf32>
    %62 = arith.addf %59, %61 : vector<4x16xf32>
    %cst_37 = arith.constant dense<0.000000e+00> : vector<4x13xf32>
    %63 = tpu.matmul %62, %36, %cst_37 {dimension_numbers = #tpu.dot_dimension_numbers<[1], [0], [0], [1], [0, 0, 1, 1], [], []>} : vector<4x16xf32>, vector<16x13xf32>, vector<4x13xf32> -> vector<4x13xf32>
    %c0_38 = arith.constant 0 : index
    %c0_39 = arith.constant 0 : index
    %c1_40 = arith.constant 1 : index
    %c0_41 = arith.constant 0 : index
    %64 = vector.load %arg3[%c0_38, %c0_39, %c1_40, %c0_41] : memref<1x4x13x13xf32, #tpu.memory_space<vmem>>, vector<1x4x1x13xf32>
    %65 = vector.shape_cast %64 : vector<1x4x1x13xf32> to vector<4x13xf32>
    %66 = vector.shape_cast %63 : vector<4x13xf32> to vector<1x4x1x13xf32>
    tpu.vector_store %arg3[%c0_38, %c0_39, %c1_40, %c0_41], %66 {strides = array<i32>} : memref<1x4x13x13xf32, #tpu.memory_space<vmem>>, vector<1x4x1x13xf32>,
    %c0_42 = arith.constant 0 : index
    %c0_43 = arith.constant 0 : index
    %c2_44 = arith.constant 2 : index
    %c0_45 = arith.constant 0 : index
    %67 = vector.load %arg2[%c0_42, %c0_43, %c2_44, %c0_45] : memref<1x4x16x16xf32, #tpu.memory_space<vmem>>, vector<1x4x1x16xf32>
    %68 = vector.shape_cast %67 : vector<1x4x1x16xf32> to vector<4x16xf32>
    %c0_46 = arith.constant 0 : index
    %c0_47 = arith.constant 0 : index
    %c3_48 = arith.constant 3 : index
    %c0_49 = arith.constant 0 : index
    %69 = vector.load %arg2[%c0_46, %c0_47, %c3_48, %c0_49] : memref<1x4x16x16xf32, #tpu.memory_space<vmem>>, vector<1x4x1x16xf32>
    %70 = vector.shape_cast %69 : vector<1x4x1x16xf32> to vector<4x16xf32>
    %71 = arith.addf %68, %70 : vector<4x16xf32>
    %c0_50 = arith.constant 0 : index
    %c0_51 = arith.constant 0 : index
    %c4_52 = arith.constant 4 : index
    %c0_53 = arith.constant 0 : index
    %72 = vector.load %arg2[%c0_50, %c0_51, %c4_52, %c0_53] : memref<1x4x16x16xf32, #tpu.memory_space<vmem>>, vector<1x4x1x16xf32>
    %73 = vector.shape_cast %72 : vector<1x4x1x16xf32> to vector<4x16xf32>
    %74 = arith.addf %71, %73 : vector<4x16xf32>
    %c0_54 = arith.constant 0 : index
    %c0_55 = arith.constant 0 : index
    %c5 = arith.constant 5 : index
    %c0_56 = arith.constant 0 : index
    %75 = vector.load %arg2[%c0_54, %c0_55, %c5, %c0_56] : memref<1x4x16x16xf32, #tpu.memory_space<vmem>>, vector<1x4x1x16xf32>
    %76 = vector.shape_cast %75 : vector<1x4x1x16xf32> to vector<4x16xf32>
    %77 = arith.addf %74, %76 : vector<4x16xf32>
    %cst_57 = arith.constant dense<0.000000e+00> : vector<4x13xf32>
    %78 = tpu.matmul %77, %36, %cst_57 {dimension_numbers = #tpu.dot_dimension_numbers<[1], [0], [0], [1], [0, 0, 1, 1], [], []>} : vector<4x16xf32>, vector<16x13xf32>, vector<4x13xf32> -> vector<4x13xf32>
    %c0_58 = arith.constant 0 : index
    %c0_59 = arith.constant 0 : index
    %c2_60 = arith.constant 2 : index
    %c0_61 = arith.constant 0 : index
    %79 = vector.load %arg3[%c0_58, %c0_59, %c2_60, %c0_61] : memref<1x4x13x13xf32, #tpu.memory_space<vmem>>, vector<1x4x1x13xf32>
    %80 = vector.shape_cast %79 : vector<1x4x1x13xf32> to vector<4x13xf32>
    %81 = vector.shape_cast %78 : vector<4x13xf32> to vector<1x4x1x13xf32>
    tpu.vector_store %arg3[%c0_58, %c0_59, %c2_60, %c0_61], %81 {strides = array<i32>} : memref<1x4x13x13xf32, #tpu.memory_space<vmem>>, vector<1x4x1x13xf32>,
    %c0_62 = arith.constant 0 : index
    %c0_63 = arith.constant 0 : index
    %c3_64 = arith.constant 3 : index
    %c0_65 = arith.constant 0 : index
    %82 = vector.load %arg2[%c0_62, %c0_63, %c3_64, %c0_65] : memref<1x4x16x16xf32, #tpu.memory_space<vmem>>, vector<1x4x1x16xf32>
    %83 = vector.shape_cast %82 : vector<1x4x1x16xf32> to vector<4x16xf32>
    %c0_66 = arith.constant 0 : index
    %c0_67 = arith.constant 0 : index
    %c4_68 = arith.constant 4 : index
    %c0_69 = arith.constant 0 : index
    %84 = vector.load %arg2[%c0_66, %c0_67, %c4_68, %c0_69] : memref<1x4x16x16xf32, #tpu.memory_space<vmem>>, vector<1x4x1x16xf32>
    %85 = vector.shape_cast %84 : vector<1x4x1x16xf32> to vector<4x16xf32>
    %86 = arith.addf %83, %85 : vector<4x16xf32>
    %c0_70 = arith.constant 0 : index
    %c0_71 = arith.constant 0 : index
    %c5_72 = arith.constant 5 : index
    %c0_73 = arith.constant 0 : index
    %87 = vector.load %arg2[%c0_70, %c0_71, %c5_72, %c0_73] : memref<1x4x16x16xf32, #tpu.memory_space<vmem>>, vector<1x4x1x16xf32>
    %88 = vector.shape_cast %87 : vector<1x4x1x16xf32> to vector<4x16xf32>
    %89 = arith.addf %86, %88 : vector<4x16xf32>
    %c0_74 = arith.constant 0 : index
    %c0_75 = arith.constant 0 : index
    %c6 = arith.constant 6 : index
    %c0_76 = arith.constant 0 : index
    %90 = vector.load %arg2[%c0_74, %c0_75, %c6, %c0_76] : memref<1x4x16x16xf32, #tpu.memory_space<vmem>>, vector<1x4x1x16xf32>
    %91 = vector.shape_cast %90 : vector<1x4x1x16xf32> to vector<4x16xf32>
    %92 = arith.addf %89, %91 : vector<4x16xf32>
    %cst_77 = arith.constant dense<0.000000e+00> : vector<4x13xf32>
    %93 = tpu.matmul %92, %36, %cst_77 {dimension_numbers = #tpu.dot_dimension_numbers<[1], [0], [0], [1], [0, 0, 1, 1], [], []>} : vector<4x16xf32>, vector<16x13xf32>, vector<4x13xf32> -> vector<4x13xf32>
    %c0_78 = arith.constant 0 : index
    %c0_79 = arith.constant 0 : index
    %c3_80 = arith.constant 3 : index
    %c0_81 = arith.constant 0 : index
    %94 = vector.load %arg3[%c0_78, %c0_79, %c3_80, %c0_81] : memref<1x4x13x13xf32, #tpu.memory_space<vmem>>, vector<1x4x1x13xf32>
    %95 = vector.shape_cast %94 : vector<1x4x1x13xf32> to vector<4x13xf32>
    %96 = vector.shape_cast %93 : vector<4x13xf32> to vector<1x4x1x13xf32>
    tpu.vector_store %arg3[%c0_78, %c0_79, %c3_80, %c0_81], %96 {strides = array<i32>} : memref<1x4x13x13xf32, #tpu.memory_space<vmem>>, vector<1x4x1x13xf32>,
    %c0_82 = arith.constant 0 : index
    %c0_83 = arith.constant 0 : index
    %c4_84 = arith.constant 4 : index
    %c0_85 = arith.constant 0 : index
    %97 = vector.load %arg2[%c0_82, %c0_83, %c4_84, %c0_85] : memref<1x4x16x16xf32, #tpu.memory_space<vmem>>, vector<1x4x1x16xf32>
    %98 = vector.shape_cast %97 : vector<1x4x1x16xf32> to vector<4x16xf32>
    %c0_86 = arith.constant 0 : index
    %c0_87 = arith.constant 0 : index
    %c5_88 = arith.constant 5 : index
    %c0_89 = arith.constant 0 : index
    %99 = vector.load %arg2[%c0_86, %c0_87, %c5_88, %c0_89] : memref<1x4x16x16xf32, #tpu.memory_space<vmem>>, vector<1x4x1x16xf32>
    %100 = vector.shape_cast %99 : vector<1x4x1x16xf32> to vector<4x16xf32>
    %101 = arith.addf %98, %100 : vector<4x16xf32>
    %c0_90 = arith.constant 0 : index
    %c0_91 = arith.constant 0 : index
    %c6_92 = arith.constant 6 : index
    %c0_93 = arith.constant 0 : index
    %102 = vector.load %arg2[%c0_90, %c0_91, %c6_92, %c0_93] : memref<1x4x16x16xf32, #tpu.memory_space<vmem>>, vector<1x4x1x16xf32>
    %103 = vector.shape_cast %102 : vector<1x4x1x16xf32> to vector<4x16xf32>
    %104 = arith.addf %101, %103 : vector<4x16xf32>
    %c0_94 = arith.constant 0 : index
    %c0_95 = arith.constant 0 : index
    %c7 = arith.constant 7 : index
    %c0_96 = arith.constant 0 : index
    %105 = vector.load %arg2[%c0_94, %c0_95, %c7, %c0_96] : memref<1x4x16x16xf32, #tpu.memory_space<vmem>>, vector<1x4x1x16xf32>
    %106 = vector.shape_cast %105 : vector<1x4x1x16xf32> to vector<4x16xf32>
    %107 = arith.addf %104, %106 : vector<4x16xf32>
    %cst_97 = arith.constant dense<0.000000e+00> : vector<4x13xf32>
    %108 = tpu.matmul %107, %36, %cst_97 {dimension_numbers = #tpu.dot_dimension_numbers<[1], [0], [0], [1], [0, 0, 1, 1], [], []>} : vector<4x16xf32>, vector<16x13xf32>, vector<4x13xf32> -> vector<4x13xf32>
    %c0_98 = arith.constant 0 : index
    %c0_99 = arith.constant 0 : index
    %c4_100 = arith.constant 4 : index
    %c0_101 = arith.constant 0 : index
    %109 = vector.load %arg3[%c0_98, %c0_99, %c4_100, %c0_101] : memref<1x4x13x13xf32, #tpu.memory_space<vmem>>, vector<1x4x1x13xf32>
    %110 = vector.shape_cast %109 : vector<1x4x1x13xf32> to vector<4x13xf32>
    %111 = vector.shape_cast %108 : vector<4x13xf32> to vector<1x4x1x13xf32>
    tpu.vector_store %arg3[%c0_98, %c0_99, %c4_100, %c0_101], %111 {strides = array<i32>} : memref<1x4x13x13xf32, #tpu.memory_space<vmem>>, vector<1x4x1x13xf32>,
    %c0_102 = arith.constant 0 : index
    %c0_103 = arith.constant 0 : index
    %c5_104 = arith.constant 5 : index
    %c0_105 = arith.constant 0 : index
    %112 = vector.load %arg2[%c0_102, %c0_103, %c5_104, %c0_105] : memref<1x4x16x16xf32, #tpu.memory_space<vmem>>, vector<1x4x1x16xf32>
    %113 = vector.shape_cast %112 : vector<1x4x1x16xf32> to vector<4x16xf32>
    %c0_106 = arith.constant 0 : index
    %c0_107 = arith.constant 0 : index
    %c6_108 = arith.constant 6 : index
    %c0_109 = arith.constant 0 : index
    %114 = vector.load %arg2[%c0_106, %c0_107, %c6_108, %c0_109] : memref<1x4x16x16xf32, #tpu.memory_space<vmem>>, vector<1x4x1x16xf32>
    %115 = vector.shape_cast %114 : vector<1x4x1x16xf32> to vector<4x16xf32>
    %116 = arith.addf %113, %115 : vector<4x16xf32>
    %c0_110 = arith.constant 0 : index
    %c0_111 = arith.constant 0 : index
    %c7_112 = arith.constant 7 : index
    %c0_113 = arith.constant 0 : index
    %117 = vector.load %arg2[%c0_110, %c0_111, %c7_112, %c0_113] : memref<1x4x16x16xf32, #tpu.memory_space<vmem>>, vector<1x4x1x16xf32>
    %118 = vector.shape_cast %117 : vector<1x4x1x16xf32> to vector<4x16xf32>
    %119 = arith.addf %116, %118 : vector<4x16xf32>
    %c0_114 = arith.constant 0 : index
    %c0_115 = arith.constant 0 : index
    %c8 = arith.constant 8 : index
    %c0_116 = arith.constant 0 : index
    %120 = vector.load %arg2[%c0_114, %c0_115, %c8, %c0_116] : memref<1x4x16x16xf32, #tpu.memory_space<vmem>>, vector<1x4x1x16xf32>
    %121 = vector.shape_cast %120 : vector<1x4x1x16xf32> to vector<4x16xf32>
    %122 = arith.addf %119, %121 : vector<4x16xf32>
    %cst_117 = arith.constant dense<0.000000e+00> : vector<4x13xf32>
    %123 = tpu.matmul %122, %36, %cst_117 {dimension_numbers = #tpu.dot_dimension_numbers<[1], [0], [0], [1], [0, 0, 1, 1], [], []>} : vector<4x16xf32>, vector<16x13xf32>, vector<4x13xf32> -> vector<4x13xf32>
    %c0_118 = arith.constant 0 : index
    %c0_119 = arith.constant 0 : index
    %c5_120 = arith.constant 5 : index
    %c0_121 = arith.constant 0 : index
    %124 = vector.load %arg3[%c0_118, %c0_119, %c5_120, %c0_121] : memref<1x4x13x13xf32, #tpu.memory_space<vmem>>, vector<1x4x1x13xf32>
    %125 = vector.shape_cast %124 : vector<1x4x1x13xf32> to vector<4x13xf32>
    %126 = vector.shape_cast %123 : vector<4x13xf32> to vector<1x4x1x13xf32>
    tpu.vector_store %arg3[%c0_118, %c0_119, %c5_120, %c0_121], %126 {strides = array<i32>} : memref<1x4x13x13xf32, #tpu.memory_space<vmem>>, vector<1x4x1x13xf32>,
    %c0_122 = arith.constant 0 : index
    %c0_123 = arith.constant 0 : index
    %c6_124 = arith.constant 6 : index
    %c0_125 = arith.constant 0 : index
    %127 = vector.load %arg2[%c0_122, %c0_123, %c6_124, %c0_125] : memref<1x4x16x16xf32, #tpu.memory_space<vmem>>, vector<1x4x1x16xf32>
    %128 = vector.shape_cast %127 : vector<1x4x1x16xf32> to vector<4x16xf32>
    %c0_126 = arith.constant 0 : index
    %c0_127 = arith.constant 0 : index
    %c7_128 = arith.constant 7 : index
    %c0_129 = arith.constant 0 : index
    %129 = vector.load %arg2[%c0_126, %c0_127, %c7_128, %c0_129] : memref<1x4x16x16xf32, #tpu.memory_space<vmem>>, vector<1x4x1x16xf32>
    %130 = vector.shape_cast %129 : vector<1x4x1x16xf32> to vector<4x16xf32>
    %131 = arith.addf %128, %130 : vector<4x16xf32>
    %c0_130 = arith.constant 0 : index
    %c0_131 = arith.constant 0 : index
    %c8_132 = arith.constant 8 : index
    %c0_133 = arith.constant 0 : index
    %132 = vector.load %arg2[%c0_130, %c0_131, %c8_132, %c0_133] : memref<1x4x16x16xf32, #tpu.memory_space<vmem>>, vector<1x4x1x16xf32>
    %133 = vector.shape_cast %132 : vector<1x4x1x16xf32> to vector<4x16xf32>
    %134 = arith.addf %131, %133 : vector<4x16xf32>
    %c0_134 = arith.constant 0 : index
    %c0_135 = arith.constant 0 : index
    %c9 = arith.constant 9 : index
    %c0_136 = arith.constant 0 : index
    %135 = vector.load %arg2[%c0_134, %c0_135, %c9, %c0_136] : memref<1x4x16x16xf32, #tpu.memory_space<vmem>>, vector<1x4x1x16xf32>
    %136 = vector.shape_cast %135 : vector<1x4x1x16xf32> to vector<4x16xf32>
    %137 = arith.addf %134, %136 : vector<4x16xf32>
    %cst_137 = arith.constant dense<0.000000e+00> : vector<4x13xf32>
    %138 = tpu.matmul %137, %36, %cst_137 {dimension_numbers = #tpu.dot_dimension_numbers<[1], [0], [0], [1], [0, 0, 1, 1], [], []>} : vector<4x16xf32>, vector<16x13xf32>, vector<4x13xf32> -> vector<4x13xf32>
    %c0_138 = arith.constant 0 : index
    %c0_139 = arith.constant 0 : index
    %c6_140 = arith.constant 6 : index
    %c0_141 = arith.constant 0 : index
    %139 = vector.load %arg3[%c0_138, %c0_139, %c6_140, %c0_141] : memref<1x4x13x13xf32, #tpu.memory_space<vmem>>, vector<1x4x1x13xf32>
    %140 = vector.shape_cast %139 : vector<1x4x1x13xf32> to vector<4x13xf32>
    %141 = vector.shape_cast %138 : vector<4x13xf32> to vector<1x4x1x13xf32>
    tpu.vector_store %arg3[%c0_138, %c0_139, %c6_140, %c0_141], %141 {strides = array<i32>} : memref<1x4x13x13xf32, #tpu.memory_space<vmem>>, vector<1x4x1x13xf32>,
    %c0_142 = arith.constant 0 : index
    %c0_143 = arith.constant 0 : index
    %c7_144 = arith.constant 7 : index
    %c0_145 = arith.constant 0 : index
    %142 = vector.load %arg2[%c0_142, %c0_143, %c7_144, %c0_145] : memref<1x4x16x16xf32, #tpu.memory_space<vmem>>, vector<1x4x1x16xf32>
    %143 = vector.shape_cast %142 : vector<1x4x1x16xf32> to vector<4x16xf32>
    %c0_146 = arith.constant 0 : index
    %c0_147 = arith.constant 0 : index
    %c8_148 = arith.constant 8 : index
    %c0_149 = arith.constant 0 : index
    %144 = vector.load %arg2[%c0_146, %c0_147, %c8_148, %c0_149] : memref<1x4x16x16xf32, #tpu.memory_space<vmem>>, vector<1x4x1x16xf32>
    %145 = vector.shape_cast %144 : vector<1x4x1x16xf32> to vector<4x16xf32>
    %146 = arith.addf %143, %145 : vector<4x16xf32>
    %c0_150 = arith.constant 0 : index
    %c0_151 = arith.constant 0 : index
    %c9_152 = arith.constant 9 : index
    %c0_153 = arith.constant 0 : index
    %147 = vector.load %arg2[%c0_150, %c0_151, %c9_152, %c0_153] : memref<1x4x16x16xf32, #tpu.memory_space<vmem>>, vector<1x4x1x16xf32>
    %148 = vector.shape_cast %147 : vector<1x4x1x16xf32> to vector<4x16xf32>
    %149 = arith.addf %146, %148 : vector<4x16xf32>
    %c0_154 = arith.constant 0 : index
    %c0_155 = arith.constant 0 : index
    %c10 = arith.constant 10 : index
    %c0_156 = arith.constant 0 : index
    %150 = vector.load %arg2[%c0_154, %c0_155, %c10, %c0_156] : memref<1x4x16x16xf32, #tpu.memory_space<vmem>>, vector<1x4x1x16xf32>
    %151 = vector.shape_cast %150 : vector<1x4x1x16xf32> to vector<4x16xf32>
    %152 = arith.addf %149, %151 : vector<4x16xf32>
    %cst_157 = arith.constant dense<0.000000e+00> : vector<4x13xf32>
    %153 = tpu.matmul %152, %36, %cst_157 {dimension_numbers = #tpu.dot_dimension_numbers<[1], [0], [0], [1], [0, 0, 1, 1], [], []>} : vector<4x16xf32>, vector<16x13xf32>, vector<4x13xf32> -> vector<4x13xf32>
    %c0_158 = arith.constant 0 : index
    %c0_159 = arith.constant 0 : index
    %c7_160 = arith.constant 7 : index
    %c0_161 = arith.constant 0 : index
    %154 = vector.load %arg3[%c0_158, %c0_159, %c7_160, %c0_161] : memref<1x4x13x13xf32, #tpu.memory_space<vmem>>, vector<1x4x1x13xf32>
    %155 = vector.shape_cast %154 : vector<1x4x1x13xf32> to vector<4x13xf32>
    %156 = vector.shape_cast %153 : vector<4x13xf32> to vector<1x4x1x13xf32>
    tpu.vector_store %arg3[%c0_158, %c0_159, %c7_160, %c0_161], %156 {strides = array<i32>} : memref<1x4x13x13xf32, #tpu.memory_space<vmem>>, vector<1x4x1x13xf32>,
    %c0_162 = arith.constant 0 : index
    %c0_163 = arith.constant 0 : index
    %c8_164 = arith.constant 8 : index
    %c0_165 = arith.constant 0 : index
    %157 = vector.load %arg2[%c0_162, %c0_163, %c8_164, %c0_165] : memref<1x4x16x16xf32, #tpu.memory_space<vmem>>, vector<1x4x1x16xf32>
    %158 = vector.shape_cast %157 : vector<1x4x1x16xf32> to vector<4x16xf32>
    %c0_166 = arith.constant 0 : index
    %c0_167 = arith.constant 0 : index
    %c9_168 = arith.constant 9 : index
    %c0_169 = arith.constant 0 : index
    %159 = vector.load %arg2[%c0_166, %c0_167, %c9_168, %c0_169] : memref<1x4x16x16xf32, #tpu.memory_space<vmem>>, vector<1x4x1x16xf32>
    %160 = vector.shape_cast %159 : vector<1x4x1x16xf32> to vector<4x16xf32>
    %161 = arith.addf %158, %160 : vector<4x16xf32>
    %c0_170 = arith.constant 0 : index
    %c0_171 = arith.constant 0 : index
    %c10_172 = arith.constant 10 : index
    %c0_173 = arith.constant 0 : index
    %162 = vector.load %arg2[%c0_170, %c0_171, %c10_172, %c0_173] : memref<1x4x16x16xf32, #tpu.memory_space<vmem>>, vector<1x4x1x16xf32>
    %163 = vector.shape_cast %162 : vector<1x4x1x16xf32> to vector<4x16xf32>
    %164 = arith.addf %161, %163 : vector<4x16xf32>
    %c0_174 = arith.constant 0 : index
    %c0_175 = arith.constant 0 : index
    %c11 = arith.constant 11 : index
    %c0_176 = arith.constant 0 : index
    %165 = vector.load %arg2[%c0_174, %c0_175, %c11, %c0_176] : memref<1x4x16x16xf32, #tpu.memory_space<vmem>>, vector<1x4x1x16xf32>
    %166 = vector.shape_cast %165 : vector<1x4x1x16xf32> to vector<4x16xf32>
    %167 = arith.addf %164, %166 : vector<4x16xf32>
    %cst_177 = arith.constant dense<0.000000e+00> : vector<4x13xf32>
    %168 = tpu.matmul %167, %36, %cst_177 {dimension_numbers = #tpu.dot_dimension_numbers<[1], [0], [0], [1], [0, 0, 1, 1], [], []>} : vector<4x16xf32>, vector<16x13xf32>, vector<4x13xf32> -> vector<4x13xf32>
    %c0_178 = arith.constant 0 : index
    %c0_179 = arith.constant 0 : index
    %c8_180 = arith.constant 8 : index
    %c0_181 = arith.constant 0 : index
    %169 = vector.load %arg3[%c0_178, %c0_179, %c8_180, %c0_181] : memref<1x4x13x13xf32, #tpu.memory_space<vmem>>, vector<1x4x1x13xf32>
    %170 = vector.shape_cast %169 : vector<1x4x1x13xf32> to vector<4x13xf32>
    %171 = vector.shape_cast %168 : vector<4x13xf32> to vector<1x4x1x13xf32>
    tpu.vector_store %arg3[%c0_178, %c0_179, %c8_180, %c0_181], %171 {strides = array<i32>} : memref<1x4x13x13xf32, #tpu.memory_space<vmem>>, vector<1x4x1x13xf32>,
    %c0_182 = arith.constant 0 : index
    %c0_183 = arith.constant 0 : index
    %c9_184 = arith.constant 9 : index
    %c0_185 = arith.constant 0 : index
    %172 = vector.load %arg2[%c0_182, %c0_183, %c9_184, %c0_185] : memref<1x4x16x16xf32, #tpu.memory_space<vmem>>, vector<1x4x1x16xf32>
    %173 = vector.shape_cast %172 : vector<1x4x1x16xf32> to vector<4x16xf32>
    %c0_186 = arith.constant 0 : index
    %c0_187 = arith.constant 0 : index
    %c10_188 = arith.constant 10 : index
    %c0_189 = arith.constant 0 : index
    %174 = vector.load %arg2[%c0_186, %c0_187, %c10_188, %c0_189] : memref<1x4x16x16xf32, #tpu.memory_space<vmem>>, vector<1x4x1x16xf32>
    %175 = vector.shape_cast %174 : vector<1x4x1x16xf32> to vector<4x16xf32>
    %176 = arith.addf %173, %175 : vector<4x16xf32>
    %c0_190 = arith.constant 0 : index
    %c0_191 = arith.constant 0 : index
    %c11_192 = arith.constant 11 : index
    %c0_193 = arith.constant 0 : index
    %177 = vector.load %arg2[%c0_190, %c0_191, %c11_192, %c0_193] : memref<1x4x16x16xf32, #tpu.memory_space<vmem>>, vector<1x4x1x16xf32>
    %178 = vector.shape_cast %177 : vector<1x4x1x16xf32> to vector<4x16xf32>
    %179 = arith.addf %176, %178 : vector<4x16xf32>
    %c0_194 = arith.constant 0 : index
    %c0_195 = arith.constant 0 : index
    %c12 = arith.constant 12 : index
    %c0_196 = arith.constant 0 : index
    %180 = vector.load %arg2[%c0_194, %c0_195, %c12, %c0_196] : memref<1x4x16x16xf32, #tpu.memory_space<vmem>>, vector<1x4x1x16xf32>
    %181 = vector.shape_cast %180 : vector<1x4x1x16xf32> to vector<4x16xf32>
    %182 = arith.addf %179, %181 : vector<4x16xf32>
    %cst_197 = arith.constant dense<0.000000e+00> : vector<4x13xf32>
    %183 = tpu.matmul %182, %36, %cst_197 {dimension_numbers = #tpu.dot_dimension_numbers<[1], [0], [0], [1], [0, 0, 1, 1], [], []>} : vector<4x16xf32>, vector<16x13xf32>, vector<4x13xf32> -> vector<4x13xf32>
    %c0_198 = arith.constant 0 : index
    %c0_199 = arith.constant 0 : index
    %c9_200 = arith.constant 9 : index
    %c0_201 = arith.constant 0 : index
    %184 = vector.load %arg3[%c0_198, %c0_199, %c9_200, %c0_201] : memref<1x4x13x13xf32, #tpu.memory_space<vmem>>, vector<1x4x1x13xf32>
    %185 = vector.shape_cast %184 : vector<1x4x1x13xf32> to vector<4x13xf32>
    %186 = vector.shape_cast %183 : vector<4x13xf32> to vector<1x4x1x13xf32>
    tpu.vector_store %arg3[%c0_198, %c0_199, %c9_200, %c0_201], %186 {strides = array<i32>} : memref<1x4x13x13xf32, #tpu.memory_space<vmem>>, vector<1x4x1x13xf32>,
    %c0_202 = arith.constant 0 : index
    %c0_203 = arith.constant 0 : index
    %c10_204 = arith.constant 10 : index
    %c0_205 = arith.constant 0 : index
    %187 = vector.load %arg2[%c0_202, %c0_203, %c10_204, %c0_205] : memref<1x4x16x16xf32, #tpu.memory_space<vmem>>, vector<1x4x1x16xf32>
    %188 = vector.shape_cast %187 : vector<1x4x1x16xf32> to vector<4x16xf32>
    %c0_206 = arith.constant 0 : index
    %c0_207 = arith.constant 0 : index
    %c11_208 = arith.constant 11 : index
    %c0_209 = arith.constant 0 : index
    %189 = vector.load %arg2[%c0_206, %c0_207, %c11_208, %c0_209] : memref<1x4x16x16xf32, #tpu.memory_space<vmem>>, vector<1x4x1x16xf32>
    %190 = vector.shape_cast %189 : vector<1x4x1x16xf32> to vector<4x16xf32>
    %191 = arith.addf %188, %190 : vector<4x16xf32>
    %c0_210 = arith.constant 0 : index
    %c0_211 = arith.constant 0 : index
    %c12_212 = arith.constant 12 : index
    %c0_213 = arith.constant 0 : index
    %192 = vector.load %arg2[%c0_210, %c0_211, %c12_212, %c0_213] : memref<1x4x16x16xf32, #tpu.memory_space<vmem>>, vector<1x4x1x16xf32>
    %193 = vector.shape_cast %192 : vector<1x4x1x16xf32> to vector<4x16xf32>
    %194 = arith.addf %191, %193 : vector<4x16xf32>
    %c0_214 = arith.constant 0 : index
    %c0_215 = arith.constant 0 : index
    %c13 = arith.constant 13 : index
    %c0_216 = arith.constant 0 : index
    %195 = vector.load %arg2[%c0_214, %c0_215, %c13, %c0_216] : memref<1x4x16x16xf32, #tpu.memory_space<vmem>>, vector<1x4x1x16xf32>
    %196 = vector.shape_cast %195 : vector<1x4x1x16xf32> to vector<4x16xf32>
    %197 = arith.addf %194, %196 : vector<4x16xf32>
    %cst_217 = arith.constant dense<0.000000e+00> : vector<4x13xf32>
    %198 = tpu.matmul %197, %36, %cst_217 {dimension_numbers = #tpu.dot_dimension_numbers<[1], [0], [0], [1], [0, 0, 1, 1], [], []>} : vector<4x16xf32>, vector<16x13xf32>, vector<4x13xf32> -> vector<4x13xf32>
    %c0_218 = arith.constant 0 : index
    %c0_219 = arith.constant 0 : index
    %c10_220 = arith.constant 10 : index
    %c0_221 = arith.constant 0 : index
    %199 = vector.load %arg3[%c0_218, %c0_219, %c10_220, %c0_221] : memref<1x4x13x13xf32, #tpu.memory_space<vmem>>, vector<1x4x1x13xf32>
    %200 = vector.shape_cast %199 : vector<1x4x1x13xf32> to vector<4x13xf32>
    %201 = vector.shape_cast %198 : vector<4x13xf32> to vector<1x4x1x13xf32>
    tpu.vector_store %arg3[%c0_218, %c0_219, %c10_220, %c0_221], %201 {strides = array<i32>} : memref<1x4x13x13xf32, #tpu.memory_space<vmem>>, vector<1x4x1x13xf32>,
    %c0_222 = arith.constant 0 : index
    %c0_223 = arith.constant 0 : index
    %c11_224 = arith.constant 11 : index
    %c0_225 = arith.constant 0 : index
    %202 = vector.load %arg2[%c0_222, %c0_223, %c11_224, %c0_225] : memref<1x4x16x16xf32, #tpu.memory_space<vmem>>, vector<1x4x1x16xf32>
    %203 = vector.shape_cast %202 : vector<1x4x1x16xf32> to vector<4x16xf32>
    %c0_226 = arith.constant 0 : index
    %c0_227 = arith.constant 0 : index
    %c12_228 = arith.constant 12 : index
    %c0_229 = arith.constant 0 : index
    %204 = vector.load %arg2[%c0_226, %c0_227, %c12_228, %c0_229] : memref<1x4x16x16xf32, #tpu.memory_space<vmem>>, vector<1x4x1x16xf32>
    %205 = vector.shape_cast %204 : vector<1x4x1x16xf32> to vector<4x16xf32>
    %206 = arith.addf %203, %205 : vector<4x16xf32>
    %c0_230 = arith.constant 0 : index
    %c0_231 = arith.constant 0 : index
    %c13_232 = arith.constant 13 : index
    %c0_233 = arith.constant 0 : index
    %207 = vector.load %arg2[%c0_230, %c0_231, %c13_232, %c0_233] : memref<1x4x16x16xf32, #tpu.memory_space<vmem>>, vector<1x4x1x16xf32>
    %208 = vector.shape_cast %207 : vector<1x4x1x16xf32> to vector<4x16xf32>
    %209 = arith.addf %206, %208 : vector<4x16xf32>
    %c0_234 = arith.constant 0 : index
    %c0_235 = arith.constant 0 : index
    %c14 = arith.constant 14 : index
    %c0_236 = arith.constant 0 : index
    %210 = vector.load %arg2[%c0_234, %c0_235, %c14, %c0_236] : memref<1x4x16x16xf32, #tpu.memory_space<vmem>>, vector<1x4x1x16xf32>
    %211 = vector.shape_cast %210 : vector<1x4x1x16xf32> to vector<4x16xf32>
    %212 = arith.addf %209, %211 : vector<4x16xf32>
    %cst_237 = arith.constant dense<0.000000e+00> : vector<4x13xf32>
    %213 = tpu.matmul %212, %36, %cst_237 {dimension_numbers = #tpu.dot_dimension_numbers<[1], [0], [0], [1], [0, 0, 1, 1], [], []>} : vector<4x16xf32>, vector<16x13xf32>, vector<4x13xf32> -> vector<4x13xf32>
    %c0_238 = arith.constant 0 : index
    %c0_239 = arith.constant 0 : index
    %c11_240 = arith.constant 11 : index
    %c0_241 = arith.constant 0 : index
    %214 = vector.load %arg3[%c0_238, %c0_239, %c11_240, %c0_241] : memref<1x4x13x13xf32, #tpu.memory_space<vmem>>, vector<1x4x1x13xf32>
    %215 = vector.shape_cast %214 : vector<1x4x1x13xf32> to vector<4x13xf32>
    %216 = vector.shape_cast %213 : vector<4x13xf32> to vector<1x4x1x13xf32>
    tpu.vector_store %arg3[%c0_238, %c0_239, %c11_240, %c0_241], %216 {strides = array<i32>} : memref<1x4x13x13xf32, #tpu.memory_space<vmem>>, vector<1x4x1x13xf32>,
    %c0_242 = arith.constant 0 : index
    %c0_243 = arith.constant 0 : index
    %c12_244 = arith.constant 12 : index
    %c0_245 = arith.constant 0 : index
    %217 = vector.load %arg2[%c0_242, %c0_243, %c12_244, %c0_245] : memref<1x4x16x16xf32, #tpu.memory_space<vmem>>, vector<1x4x1x16xf32>
    %218 = vector.shape_cast %217 : vector<1x4x1x16xf32> to vector<4x16xf32>
    %c0_246 = arith.constant 0 : index
    %c0_247 = arith.constant 0 : index
    %c13_248 = arith.constant 13 : index
    %c0_249 = arith.constant 0 : index
    %219 = vector.load %arg2[%c0_246, %c0_247, %c13_248, %c0_249] : memref<1x4x16x16xf32, #tpu.memory_space<vmem>>, vector<1x4x1x16xf32>
    %220 = vector.shape_cast %219 : vector<1x4x1x16xf32> to vector<4x16xf32>
    %221 = arith.addf %218, %220 : vector<4x16xf32>
    %c0_250 = arith.constant 0 : index
    %c0_251 = arith.constant 0 : index
    %c14_252 = arith.constant 14 : index
    %c0_253 = arith.constant 0 : index
    %222 = vector.load %arg2[%c0_250, %c0_251, %c14_252, %c0_253] : memref<1x4x16x16xf32, #tpu.memory_space<vmem>>, vector<1x4x1x16xf32>
    %223 = vector.shape_cast %222 : vector<1x4x1x16xf32> to vector<4x16xf32>
    %224 = arith.addf %221, %223 : vector<4x16xf32>
    %c0_254 = arith.constant 0 : index
    %c0_255 = arith.constant 0 : index
    %c15 = arith.constant 15 : index
    %c0_256 = arith.constant 0 : index
    %225 = vector.load %arg2[%c0_254, %c0_255, %c15, %c0_256] : memref<1x4x16x16xf32, #tpu.memory_space<vmem>>, vector<1x4x1x16xf32>
    %226 = vector.shape_cast %225 : vector<1x4x1x16xf32> to vector<4x16xf32>
    %227 = arith.addf %224, %226 : vector<4x16xf32>
    %cst_257 = arith.constant dense<0.000000e+00> : vector<4x13xf32>
    %228 = tpu.matmul %227, %36, %cst_257 {dimension_numbers = #tpu.dot_dimension_numbers<[1], [0], [0], [1], [0, 0, 1, 1], [], []>} : vector<4x16xf32>, vector<16x13xf32>, vector<4x13xf32> -> vector<4x13xf32>
    %c0_258 = arith.constant 0 : index
    %c0_259 = arith.constant 0 : index
    %c12_260 = arith.constant 12 : index
    %c0_261 = arith.constant 0 : index
    %229 = vector.load %arg3[%c0_258, %c0_259, %c12_260, %c0_261] : memref<1x4x13x13xf32, #tpu.memory_space<vmem>>, vector<1x4x1x13xf32>
    %230 = vector.shape_cast %229 : vector<1x4x1x13xf32> to vector<4x13xf32>
    %231 = vector.shape_cast %228 : vector<4x13xf32> to vector<1x4x1x13xf32>
    tpu.vector_store %arg3[%c0_258, %c0_259, %c12_260, %c0_261], %231 {strides = array<i32>} : memref<1x4x13x13xf32, #tpu.memory_space<vmem>>, vector<1x4x1x13xf32>,
    return
  }
  func.func @transform_0(%arg0: i32, %arg1: i32) -> (i32, i32, i32, i32) {
    %c0_i32 = arith.constant 0 : i32
    %c0_i32_0 = arith.constant 0 : i32
    %c0_i32_1 = arith.constant 0 : i32
    return %arg0, %arg1, %c0_i32, %c0_i32_0 : i32, i32, i32, i32
  }
  func.func @transform_1(%arg0: i32, %arg1: i32) -> (i32, i32, i32, i32) {
    %c0_i32 = arith.constant 0 : i32
    %c0_i32_0 = arith.constant 0 : i32
    %c0_i32_1 = arith.constant 0 : i32
    return %arg0, %arg1, %c0_i32, %c0_i32_0 : i32, i32, i32, i32
  }
}

</mosaic_0001>

<llo_original>
// kernel: tpu_custom_call.1
$region0: #{tpu_custom_call.1}
  #allocation0 [shape = 'u32[]', space=smem, size = 0x4, offset = 0x4, fixed_abs, tag = 'smem constant byte address 0x4 - core index']
  #allocation1 [shape = 'u32[144,128]{1,0:T(1,128)}', space=vmem, size = 0x12000, scoped, tag = 'internal scratch']
  %s0 = inlined_call_operand.hbm [shape: f32[2,4,16,16], index: 0, kind: input, shape index: {}]
  %s1 = inlined_call_operand.vmem [shape: f32[2,4,13,13], index: 1, kind: output, shape index: {}]
  %s2 = sld [smem:[#allocation0]]
  $region41: #{tpu_custom_call.1} parent=0
    _
  %s4 = ssub.s32 1, %s2
  %s5 = scalar_select 0, %s4, %s2
  $region1: #{tpu_custom_call.1} parent=0
    #allocation2 [shape = 'u8[65536]{0}', space=vmem, size = 0x10000, scoped, tag = 'input window, operand 0']
    #allocation3 [shape = 's32[2]{0}', space=sflag, size = 0x8, scoped, tag = 'scoped memory for tpu_custom_call.1']
    %6 = vsyncpa [#allocation3], 0
    %s7 = scalar_lea.sflag [#allocation3], 1
    %8 = vsyncpa %s7, 0
    loop: start=0, step=1, limit=4
    $region2: #{tpu_custom_call.1} parent=1 // loop_pre_header
      _
    $region3: #{tpu_custom_call.1} parent=1 // loop_header
      %s10 = sphi 0, %s14
      %p11 = scmp.ge.s32.totalorder %s10, 4
      %s17 = sphi 0, %s29
      %s18 = sphi 0, %s25
      %s19 = sphi 0, %s17
      %s20 = sphi 0, %s18
      %s21 = sphi 0, %s19
      %s22 = sphi 0, %s20
      %s34 = sphi 0, %s36
      %s37 = sphi 0, %s34
      %s38 = sphi 0, %s37
      %s54 = sphi 0, %s38
      %s62 = sphi 0, %s64
      %s65 = sphi 0, %s62
      %s66 = sphi 0, %s65
      %s82 = sphi 0, %s66
    $region4: #{tpu_custom_call.1} parent=1 // loop_header_branch
      %13 = sbr.rel (%p11) target = $region8
    $region5: #{tpu_custom_call.1} parent=1 // loop_body
      %s15 = ssub.s32 %s10, 1
      %s16 = ssub.s32 %s10, 2
      %s23 = sadd.s32 1, %s18
      %p24 = scmp.ge.s32.totalorder %s23, 1
      %s25 = scalar_select %p24, 0, %s23
      %s26 = sadd.s32 1, %s17
      %s27 = scalar_select %p24, %s26, %s17
      %p28 = scmp.ge.s32.totalorder %s27, 2
      %s29 = scalar_select %p28, 0, %s27
      %s30 = ssub.s32 %s17, %s29
      %s31 = ssub.s32 %s18, %s25
      %s32 = sor.u32 %s30, %s31
      %p33 = scmp.eq.s32.totalorder %s32, 0
      %s35 = sadd.s32 %s34, 1
      %s36 = scalar_select %p33, %s34, %s35
      %p39 = pneg %p33
      %p40 = scmp.eq.s32.totalorder %s10, 1
      %p41 = por %p39, %p40
      %p42 = scmp.ne.s32.totalorder %s34, %s37
      %p43 = scmp.eq.s32.totalorder %s10, 0
      %p44 = por %p42, %p43
      %p45 = scmp.ne.s32.totalorder %s34, %s37
      %p46 = scmp.eq.s32.totalorder %s15, 1
      %p47 = por %p45, %p46
      %p48 = scmp.ne.s32.totalorder %s37, %s38
      %p49 = scmp.eq.s32.totalorder %s15, 0
      %p50 = por %p48, %p49
      %p51 = scmp.ne.s32.totalorder %s37, %s38
      %p52 = scmp.eq.s32.totalorder %s16, 1
      %p53 = por %p51, %p52
      %p55 = scmp.ne.s32.totalorder %s38, %s54
      %p56 = scmp.eq.s32.totalorder %s16, 0
      %p57 = por %p55, %p56
      %s58 = ssub.s32 %s17, %s29
      %s59 = ssub.s32 %s18, %s25
      %s60 = sor.u32 %s58, %s59
      %p61 = scmp.eq.s32.totalorder %s60, 0
      %s63 = sadd.s32 %s62, 1
      %s64 = scalar_select %p61, %s62, %s63
      %p67 = pneg %p61
      %p68 = scmp.eq.s32.totalorder %s10, 1
      %p69 = por %p67, %p68
      %p70 = scmp.ne.s32.totalorder %s62, %s65
      %p71 = scmp.eq.s32.totalorder %s10, 0
      %p72 = por %p70, %p71
      %p73 = scmp.ne.s32.totalorder %s62, %s65
      %p74 = scmp.eq.s32.totalorder %s15, 1
      %p75 = por %p73, %p74
      %p76 = scmp.ne.s32.totalorder %s65, %s66
      %p77 = scmp.eq.s32.totalorder %s15, 0
      %p78 = por %p76, %p77
      %p79 = scmp.ne.s32.totalorder %s65, %s66
      %p80 = scmp.eq.s32.totalorder %s16, 1
      %p81 = por %p79, %p80
      %p83 = scmp.ne.s32.totalorder %s66, %s82
      %p84 = scmp.eq.s32.totalorder %s16, 0
      %p85 = por %p83, %p84
      %p86 = scmp.le.s32.totalorder 1, %s10
      %p87 = scmp.lt.s32.totalorder %s10, 3
      %p88 = pnand %p86, %p87
      %p89 = pneg %p88
      // Predicated region
      $region9: #{tpu_custom_call.1} parent=5 // pred_check
        _
      $region10: #{tpu_custom_call.1} parent=5 // pred_check_branch
        %91 = sbr.rel (%p88) target = $region12
      $region11: #{tpu_custom_call.1} parent=5 // pred_region
        %s92 = ssub.s32 %s10, 1
      $region12: #{tpu_custom_call.1} parent=5 // pred_fallthru
        _
      %p93 = scmp.lt.s32.totalorder %s10, 2
      // Predicated region
      $region13: #{tpu_custom_call.1} parent=5 // pred_check
        %p94 = pneg %p93
      $region14: #{tpu_custom_call.1} parent=5 // pred_check_branch
        %96 = sbr.rel (%p94) target = $region16
      $region15: #{tpu_custom_call.1} parent=5 // pred_region
        // Predicated region
        $region17: #{tpu_custom_call.1} parent=15 // pred_check
          %p97 = pneg %p44
        $region18: #{tpu_custom_call.1} parent=15 // pred_check_branch
          %99 = sbr.rel (%p97) target = $region20
        $region19: #{tpu_custom_call.1} parent=15 // pred_region
          %s100 = sand.u32 %s34, 1
          %s101 = scalar_lea.sflag [#allocation3], %s100
          %s102 = sand.u32 %s34, 1
          %s103 = smul.addr %s102, 64
          %s104 = scalar_lea.vmem [#allocation2], %s103
          %s105 = smul.u32 4, %s18
          %s107 = ssub.s32 1024, 1024
          %108 = vsyncadd %s101, %s107
          %s109 = smul.addr %s105, 2
          %s110 = smul.addr %s17, 8
          %s111 = sadd.s32 %s109, %s110
          %s112 = smul.addr %s111, 128
          %s113 = scalar_lea.hbm %s0, %s112
          %s114 = sshll.u32 %s104, 4
          %s115 = int_to_ptr.vmem [resolvable:$true] %s114
          %120 = dma.hbm_to_vmem [thread:$0]  %s113, 1024, %s115, %s101, 128, 128, 8
        $region20: #{tpu_custom_call.1} parent=15 // pred_fallthru
          _
      $region16: #{tpu_custom_call.1} parent=5 // pred_fallthru
        _
      %p121 = scmp.le.s32.totalorder 1, %s10
      %p122 = scmp.lt.s32.totalorder %s10, 3
      %p123 = pnand %p121, %p122
      %p124 = pneg %p123
      // Predicated region
      $region21: #{tpu_custom_call.1} parent=5 // pred_check
        _
      $region22: #{tpu_custom_call.1} parent=5 // pred_check_branch
        %126 = sbr.rel (%p123) target = $region24
      $region23: #{tpu_custom_call.1} parent=5 // pred_region
        %s127 = ssub.s32 %s10, 1
        %s128 = sand.u32 %s37, 1
        %s129 = scalar_lea.sflag [#allocation3], %s128
        %s130 = sand.u32 %s37, 1
        %s131 = smul.addr %s130, 64
        %s132 = scalar_lea.vmem [#allocation2], %s131
        // Predicated region
        $region25: #{tpu_custom_call.1} parent=23 // pred_check
          %p133 = pneg %p50
        $region26: #{tpu_custom_call.1} parent=23 // pred_check_branch
          %135 = sbr.rel (%p133) target = $region28
        $region27: #{tpu_custom_call.1} parent=23 // pred_region
          %136 = dma.done %s129, 1024
        $region28: #{tpu_custom_call.1} parent=23 // pred_fallthru
          _
        %s137 = sand.u32 %s37, 1
        %s138 = scalar_lea.sflag [#allocation3], %s137
        %s139 = sand.u32 %s37, 1
        %s140 = smul.addr %s139, 64
        %s141 = scalar_lea.vmem [#allocation2], %s140
        %p142 = pneg %p50
        %p143 = pneg %p47
        %p144 = pneg %p78
        %p145 = pneg %p75
        %s146 = smul.u32 4, %s20
        %p147 = scmp.lt.s32.totalorder %s19, 1
        %s148 = scalar_select %p147, %s19, 1
        %p149 = scmp.lt.s32.totalorder %s146, 3
        %s150 = scalar_select %p149, %s146, 3
        %s151 = smul.addr %s150, 2
        %s152 = smul.addr %s148, 8
        %s153 = sadd.s32 %s151, %s152
        %s154 = smul.addr %s153, 8
        %s155 = scalar_lea.vmem %s1, %s154
        %s156 = smul.u32 4, %s20
        %s157 = smul.u32 4, %s20
        %p158 = scmp.lt.s32.totalorder %s19, 1
        %s159 = scalar_select %p158, %s19, 1
        %p160 = scmp.lt.s32.totalorder %s157, 3
        %s161 = scalar_select %p160, %s157, 3
        %s162 = smul.addr %s161, 2
        %s163 = smul.addr %s159, 8
        %s164 = sadd.s32 %s162, %s163
        %s165 = smul.addr %s164, 8
        %s166 = scalar_lea.vmem %s1, %s165
        %s167 = smul.u32 4, %s20
        %v168 = vlaneseq
        %v169 = vshrl.u32 %v168, 7
        %v170 = vadd.s32 %v169, 8
        %v171 = vlaneseq
        %v172 = vand.u32 %v171, 127
        %vm173 = vcmp.eq.s32.totalorder %v169, %v172
        %vm174 = vcmp.eq.s32.totalorder %v170, %v172
        %v175 = vsel %vm173, 1, 0
        %v176 = vsel %vm174, 1, 0
        %v177 = vcvt.s32.f32 %v175
        %v178 = vcvt.s32.f32 %v176
        %v179 = vadd.f32 %v177, 0.0
        %v180 = vadd.f32 %v178, 0.0
        %v181 = vadd.s32 %v172, 1
        %vm182 = vcmp.eq.s32.totalorder %v169, %v181
        %vm183 = vcmp.eq.s32.totalorder %v170, %v181
        %v184 = vsel %vm182, 1, 0
        %v185 = vsel %vm183, 1, 0
        %v186 = vcvt.s32.f32 %v184
        %v187 = vcvt.s32.f32 %v185
        %v188 = vadd.f32 %v179, %v186
        %v189 = vadd.f32 %v180, %v187
        %v190 = vadd.s32 %v172, 2
        %vm191 = vcmp.eq.s32.totalorder %v169, %v190
        %vm192 = vcmp.eq.s32.totalorder %v170, %v190
        %v193 = vsel %vm191, 1, 0
        %v194 = vsel %vm192, 1, 0
        %v195 = vcvt.s32.f32 %v193
        %v196 = vcvt.s32.f32 %v194
        %v197 = vadd.f32 %v188, %v195
        %v198 = vadd.f32 %v189, %v196
        %v199 = vadd.s32 %v172, 3
        %vm200 = vcmp.eq.s32.totalorder %v169, %v199
        %vm201 = vcmp.eq.s32.totalorder %v170, %v199
        %v202 = vsel %vm200, 1, 0
        %v203 = vsel %vm201, 1, 0
        %v204 = vcvt.s32.f32 %v202
        %v205 = vcvt.s32.f32 %v203
        %v206 = vadd.f32 %v197, %v204
        %v207 = vadd.f32 %v198, %v205
        %v208 = vmul.f32 %v206, 0.0625
        %v209 = vmul.f32 %v207, 0.0625
        %v210 = vld [vmem:[%s132] sm:$0x1]
        %v211 = vld [vmem:[%s132 + $0x10] sm:$0x1]
        %v212 = vld [vmem:[%s132 + $0x20] sm:$0x1]
        %v213 = vld [vmem:[%s132 + $0x30] sm:$0x1]
        %v214 = vld [vmem:[%s132 + $0x1] sm:$0x1]
        %v215 = vld [vmem:[%s132 + $0x11] sm:$0x1]
        %v216 = vld [vmem:[%s132 + $0x21] sm:$0x1]
        %v217 = vld [vmem:[%s132 + $0x31] sm:$0x1]
        %v218 = vadd.f32 %v210, %v214
        %v219 = vadd.f32 %v211, %v215
        %v220 = vadd.f32 %v212, %v216
        %v221 = vadd.f32 %v213, %v217
        %v222 = vld [vmem:[%s132 + $0x2] sm:$0x1]
        %v223 = vld [vmem:[%s132 + $0x12] sm:$0x1]
        %v224 = vld [vmem:[%s132 + $0x22] sm:$0x1]
        %v225 = vld [vmem:[%s132 + $0x32] sm:$0x1]
        %v226 = vadd.f32 %v218, %v222
        %v227 = vadd.f32 %v219, %v223
        %v228 = vadd.f32 %v220, %v224
        %v229 = vadd.f32 %v221, %v225
        %v230 = vld [vmem:[%s132 + $0x3] sm:$0x1]
        %v231 = vld [vmem:[%s132 + $0x13] sm:$0x1]
        %v232 = vld [vmem:[%s132 + $0x23] sm:$0x1]
        %v233 = vld [vmem:[%s132 + $0x33] sm:$0x1]
        %v234 = vadd.f32 %v226, %v230
        %v235 = vadd.f32 %v227, %v231
        %v236 = vadd.f32 %v228, %v232
        %v237 = vadd.f32 %v229, %v233
        %v242 = vrot.slane %v235, 7
        %vm243 = vcmask 1041409
        %v244 = vsel %vm243, %v242, %v234
        %v245 = vrot.slane %v236, 6
        %vm246 = vcmask 1042434
        %v247 = vsel %vm246, %v245, %v244
        %v248 = vrot.slane %v237, 5
        %vm249 = vcmask 1043459
        %v250 = vsel %vm249, %v248, %v247
        %vm251 = vcmask 130048
        %v252 = vsel %vm251, %v250, 0
        %254 = vmatprep.subr.mxu0 0.0
        %255 = vmatpush1.msra.mxu0 0.0
        %256 = vmatprep.subr.mxu0 0.0
        %257 = vmatpush1.msra.mxu0 0.0
        %258 = vmatprep.subr.mxu0 0.0
        %259 = vmatpush1.msra.mxu0 0.0
        %260 = vmatprep.subr.mxu0 0.0
        %261 = vmatpush1.msra.mxu0 0.0
        %262 = vmatprep.subr.mxu0 0.0
        %263 = vmatpush1.msra.mxu0 0.0
        %264 = vmatprep.subr.mxu0 0.0
        %265 = vmatpush1.msra.mxu0 0.0
        %266 = vmatprep.subr.mxu0 0.0
        %267 = vmatpush1.msra.mxu0 0.0
        %268 = vmatprep.subr.mxu0 0.0
        %269 = vmatpush1.msra.mxu0 0.0
        %270 = vmatprep.subr.mxu0 0.0
        %271 = vmatpush1.msra.mxu0 0.0
        %272 = vmatprep.subr.mxu0 0.0
        %273 = vmatpush1.msra.mxu0 0.0
        %274 = vmatprep.subr.mxu0 0.0
        %275 = vmatpush1.msra.mxu0 0.0
        %276 = vmatprep.subr.mxu0 0.0
        %277 = vmatpush1.msra.mxu0 0.0
        %278 = vmatprep.subr.mxu0 0.0
        %279 = vmatpush1.msra.mxu0 0.0
        %280 = vmatprep.subr.mxu0 0.0
        %281 = vmatpush1.msra.mxu0 0.0
        %282 = vmatprep.subr.mxu0 0.0
        %283 = vmatpush1.msra.mxu0 %v209
        %284 = vmatprep.subr.mxu0 0.0
        %285 = vmatpush1.msra.mxu0 %v208
        %286 = vmatprep.subr.mxu0 0.0
        %287 = vmatpush2.msra.mxu0 0.0
        %288 = vmatprep.subr.mxu0 0.0
        %289 = vmatpush2.msra.mxu0 0.0
        %290 = vmatprep.subr.mxu0 0.0
        %291 = vmatpush2.msra.mxu0 0.0
        %292 = vmatprep.subr.mxu0 0.0
        %293 = vmatpush2.msra.mxu0 0.0
        %294 = vmatprep.subr.mxu0 0.0
        %295 = vmatpush2.msra.mxu0 0.0
        %296 = vmatprep.subr.mxu0 0.0
        %297 = vmatpush2.msra.mxu0 0.0
        %298 = vmatprep.subr.mxu0 0.0
        %299 = vmatpush2.msra.mxu0 0.0
        %300 = vmatprep.subr.mxu0 0.0
        %301 = vmatpush2.msra.mxu0 0.0
        %302 = vmatprep.subr.mxu0 0.0
        %303 = vmatpush2.msra.mxu0 0.0
        %304 = vmatprep.subr.mxu0 0.0
        %305 = vmatpush2.msra.mxu0 0.0
        %306 = vmatprep.subr.mxu0 0.0
        %307 = vmatpush2.msra.mxu0 0.0
        %308 = vmatprep.subr.mxu0 0.0
        %309 = vmatpush2.msra.mxu0 0.0
        %310 = vmatprep.subr.mxu0 0.0
        %311 = vmatpush2.msra.mxu0 0.0
        %312 = vmatprep.subr.mxu0 0.0
        %313 = vmatpush2.msra.mxu0 0.0
        %314 = vmatprep.subr.mxu0 0.0
        %315 = vmatpush2.msra.mxu0 0.0
        %316 = vmatprep.subr.mxu0 0.0
        %317 = vmatpush2.msra.mxu0 0.0
        %318 = vmatprep.mubr.f32.mxu0 0.0
        %319 = vmatmul.mubr.f32.gmra.mxu0 %v252
        %v320 = vpop.f32.mrf.mxu0
        %v321 = vadd.f32 0.0, %v320
        %v322 = vpop.f32.mrf.mxu0
        %323 = vdwg.mxu0
        %v326 = vunpack.c.l.s4 1966171168
        %v327 = vunpack.c.0.s8 %v326
        %v328 = vlaneseq
        %v329 = vshrl.u32 %v328, 7
        %v330 = vsub.s32 %v327, %v329
        %v331 = vrot.slane %v321, %v330
        %v332 = vcombine.high %v331, %v331
        %v334 = vunpack.c.l.s4 1966171168
        %v335 = vunpack.c.0.s8 %v334
        %v336 = vlaneseq
        %v337 = vshrl.u32 %v336, 7
        %v338 = vsub.s32 %v335, %v337
        %v339 = vrot.slane %v331, %v338
        %v341 = vunpack.c.l.s4 1966171168
        %v342 = vunpack.c.0.s8 %v341
        %v343 = vlaneseq
        %v344 = vshrl.u32 %v343, 7
        %v345 = vsub.s32 %v342, %v344
        %v346 = vrot.slane %v332, %v345
        %v347 = vcombine.high %v339, %v339
        %v348 = vcombine.high %v346, %v346
        %vm353 = vcmask 98304
        %354 = vst.msk [vmem:[%s166] sm:$0x1] %vm353, %v339
        %355 = vst.msk [vmem:[%s166 + $0x10] sm:$0x1] %vm353, %v346
        %356 = vst.msk [vmem:[%s166 + $0x20] sm:$0x1] %vm353, %v347
        %357 = vst.msk [vmem:[%s166 + $0x30] sm:$0x1] %vm353, %v348
        %v358 = vld [vmem:[%s132 + $0x1] sm:$0x1]
        %v359 = vld [vmem:[%s132 + $0x11] sm:$0x1]
        %v360 = vld [vmem:[%s132 + $0x21] sm:$0x1]
        %v361 = vld [vmem:[%s132 + $0x31] sm:$0x1]
        %v362 = vld [vmem:[%s132 + $0x2] sm:$0x1]
        %v363 = vld [vmem:[%s132 + $0x12] sm:$0x1]
        %v364 = vld [vmem:[%s132 + $0x22] sm:$0x1]
        %v365 = vld [vmem:[%s132 + $0x32] sm:$0x1]
        %v366 = vadd.f32 %v358, %v362
        %v367 = vadd.f32 %v359, %v363
        %v368 = vadd.f32 %v360, %v364
        %v369 = vadd.f32 %v361, %v365
        %v370 = vld [vmem:[%s132 + $0x3] sm:$0x1]
        %v371 = vld [vmem:[%s132 + $0x13] sm:$0x1]
        %v372 = vld [vmem:[%s132 + $0x23] sm:$0x1]
        %v373 = vld [vmem:[%s132 + $0x33] sm:$0x1]
        %v374 = vadd.f32 %v366, %v370
        %v375 = vadd.f32 %v367, %v371
        %v376 = vadd.f32 %v368, %v372
        %v377 = vadd.f32 %v369, %v373
        %v378 = vld [vmem:[%s132 + $0x4] sm:$0x1]
        %v379 = vld [vmem:[%s132 + $0x14] sm:$0x1]
        %v380 = vld [vmem:[%s132 + $0x24] sm:$0x1]
        %v381 = vld [vmem:[%s132 + $0x34] sm:$0x1]
        %v382 = vadd.f32 %v374, %v378
        %v383 = vadd.f32 %v375, %v379
        %v384 = vadd.f32 %v376, %v380
        %v385 = vadd.f32 %v377, %v381
        %v390 = vrot.slane %v383, 7
        %v391 = vsel %vm243, %v390, %v382
        %v392 = vrot.slane %v384, 6
        %v393 = vsel %vm246, %v392, %v391
        %v394 = vrot.slane %v385, 5
        %v395 = vsel %vm249, %v394, %v393
        %v396 = vsel %vm251, %v395, 0
        %398 = vmatprep.subr.mxu0 0.0
        %399 = vmatpush1.msra.mxu0 0.0
        %400 = vmatprep.subr.mxu0 0.0
        %401 = vmatpush1.msra.mxu0 0.0
        %402 = vmatprep.subr.mxu0 0.0
        %403 = vmatpush1.msra.mxu0 0.0
        %404 = vmatprep.subr.mxu0 0.0
        %405 = vmatpush1.msra.mxu0 0.0
        %406 = vmatprep.subr.mxu0 0.0
        %407 = vmatpush1.msra.mxu0 0.0
        %408 = vmatprep.subr.mxu0 0.0
        %409 = vmatpush1.msra.mxu0 0.0
        %410 = vmatprep.subr.mxu0 0.0
        %411 = vmatpush1.msra.mxu0 0.0
        %412 = vmatprep.subr.mxu0 0.0
        %413 = vmatpush1.msra.mxu0 0.0
        %414 = vmatprep.subr.mxu0 0.0
        %415 = vmatpush1.msra.mxu0 0.0
        %416 = vmatprep.subr.mxu0 0.0
        %417 = vmatpush1.msra.mxu0 0.0
        %418 = vmatprep.subr.mxu0 0.0
        %419 = vmatpush1.msra.mxu0 0.0
        %420 = vmatprep.subr.mxu0 0.0
        %421 = vmatpush1.msra.mxu0 0.0
        %422 = vmatprep.subr.mxu0 0.0
        %423 = vmatpush1.msra.mxu0 0.0
        %424 = vmatprep.subr.mxu0 0.0
        %425 = vmatpush1.msra.mxu0 0.0
        %426 = vmatprep.subr.mxu0 0.0
        %427 = vmatpush1.msra.mxu0 %v209
        %428 = vmatprep.subr.mxu0 0.0
        %429 = vmatpush1.msra.mxu0 %v208
        %430 = vmatprep.subr.mxu0 0.0
        %431 = vmatpush2.msra.mxu0 0.0
        %432 = vmatprep.subr.mxu0 0.0
        %433 = vmatpush2.msra.mxu0 0.0
        %434 = vmatprep.subr.mxu0 0.0
        %435 = vmatpush2.msra.mxu0 0.0
        %436 = vmatprep.subr.mxu0 0.0
        %437 = vmatpush2.msra.mxu0 0.0
        %438 = vmatprep.subr.mxu0 0.0
        %439 = vmatpush2.msra.mxu0 0.0
        %440 = vmatprep.subr.mxu0 0.0
        %441 = vmatpush2.msra.mxu0 0.0
        %442 = vmatprep.subr.mxu0 0.0
        %443 = vmatpush2.msra.mxu0 0.0
        %444 = vmatprep.subr.mxu0 0.0
        %445 = vmatpush2.msra.mxu0 0.0
        %446 = vmatprep.subr.mxu0 0.0
        %447 = vmatpush2.msra.mxu0 0.0
        %448 = vmatprep.subr.mxu0 0.0
        %449 = vmatpush2.msra.mxu0 0.0
        %450 = vmatprep.subr.mxu0 0.0
        %451 = vmatpush2.msra.mxu0 0.0
        %452 = vmatprep.subr.mxu0 0.0
        %453 = vmatpush2.msra.mxu0 0.0
        %454 = vmatprep.subr.mxu0 0.0
        %455 = vmatpush2.msra.mxu0 0.0
        %456 = vmatprep.subr.mxu0 0.0
        %457 = vmatpush2.msra.mxu0 0.0
        %458 = vmatprep.subr.mxu0 0.0
        %459 = vmatpush2.msra.mxu0 0.0
        %460 = vmatprep.subr.mxu0 0.0
        %461 = vmatpush2.msra.mxu0 0.0
        %462 = vmatprep.mubr.f32.mxu0 0.0
        %463 = vmatmul.mubr.f32.gmra.mxu0 %v396
        %v464 = vpop.f32.mrf.mxu0
        %v465 = vadd.f32 0.0, %v464
        %v466 = vpop.f32.mrf.mxu0
        %467 = vdwg.mxu0
        %v470 = vunpack.c.l.s4 1966171168
        %v471 = vunpack.c.0.s8 %v470
        %v472 = vlaneseq
        %v473 = vshrl.u32 %v472, 7
        %v474 = vsub.s32 %v471, %v473
        %v475 = vrot.slane %v465, %v474
        %v476 = vcombine.high %v475, %v475
        %v478 = vunpack.c.l.s4 1966171168
        %v479 = vunpack.c.0.s8 %v478
        %v480 = vlaneseq
        %v481 = vshrl.u32 %v480, 7
        %v482 = vsub.s32 %v479, %v481
        %v483 = vrot.slane %v475, %v482
        %v485 = vunpack.c.l.s4 1966171168
        %v486 = vunpack.c.0.s8 %v485
        %v487 = vlaneseq
        %v488 = vshrl.u32 %v487, 7
        %v489 = vsub.s32 %v486, %v488
        %v490 = vrot.slane %v476, %v489
        %v491 = vcombine.high %v483, %v483
        %v492 = vcombine.high %v490, %v490
        %497 = vst.msk [vmem:[%s166 + $0x1] sm:$0x1] %vm353, %v483
        %498 = vst.msk [vmem:[%s166 + $0x11] sm:$0x1] %vm353, %v490
        %499 = vst.msk [vmem:[%s166 + $0x21] sm:$0x1] %vm353, %v491
        %500 = vst.msk [vmem:[%s166 + $0x31] sm:$0x1] %vm353, %v492
        %v501 = vld [vmem:[%s132 + $0x2] sm:$0x1]
        %v502 = vld [vmem:[%s132 + $0x12] sm:$0x1]
        %v503 = vld [vmem:[%s132 + $0x22] sm:$0x1]
        %v504 = vld [vmem:[%s132 + $0x32] sm:$0x1]
        %v505 = vld [vmem:[%s132 + $0x3] sm:$0x1]
        %v506 = vld [vmem:[%s132 + $0x13] sm:$0x1]
        %v507 = vld [vmem:[%s132 + $0x23] sm:$0x1]
        %v508 = vld [vmem:[%s132 + $0x33] sm:$0x1]
        %v509 = vadd.f32 %v501, %v505
        %v510 = vadd.f32 %v502, %v506
        %v511 = vadd.f32 %v503, %v507
        %v512 = vadd.f32 %v504, %v508
        %v513 = vld [vmem:[%s132 + $0x4] sm:$0x1]
        %v514 = vld [vmem:[%s132 + $0x14] sm:$0x1]
        %v515 = vld [vmem:[%s132 + $0x24] sm:$0x1]
        %v516 = vld [vmem:[%s132 + $0x34] sm:$0x1]
        %v517 = vadd.f32 %v509, %v513
        %v518 = vadd.f32 %v510, %v514
        %v519 = vadd.f32 %v511, %v515
        %v520 = vadd.f32 %v512, %v516
        %v521 = vld [vmem:[%s132 + $0x5] sm:$0x1]
        %v522 = vld [vmem:[%s132 + $0x15] sm:$0x1]
        %v523 = vld [vmem:[%s132 + $0x25] sm:$0x1]
        %v524 = vld [vmem:[%s132 + $0x35] sm:$0x1]
        %v525 = vadd.f32 %v517, %v521
        %v526 = vadd.f32 %v518, %v522
        %v527 = vadd.f32 %v519, %v523
        %v528 = vadd.f32 %v520, %v524
        %v533 = vrot.slane %v526, 7
        %v534 = vsel %vm243, %v533, %v525
        %v535 = vrot.slane %v527, 6
        %v536 = vsel %vm246, %v535, %v534
        %v537 = vrot.slane %v528, 5
        %v538 = vsel %vm249, %v537, %v536
        %v539 = vsel %vm251, %v538, 0
        %541 = vmatprep.subr.mxu0 0.0
        %542 = vmatpush1.msra.mxu0 0.0
        %543 = vmatprep.subr.mxu0 0.0
        %544 = vmatpush1.msra.mxu0 0.0
        %545 = vmatprep.subr.mxu0 0.0
        %546 = vmatpush1.msra.mxu0 0.0
        %547 = vmatprep.subr.mxu0 0.0
        %548 = vmatpush1.msra.mxu0 0.0
        %549 = vmatprep.subr.mxu0 0.0
        %550 = vmatpush1.msra.mxu0 0.0
        %551 = vmatprep.subr.mxu0 0.0
        %552 = vmatpush1.msra.mxu0 0.0
        %553 = vmatprep.subr.mxu0 0.0
        %554 = vmatpush1.msra.mxu0 0.0
        %555 = vmatprep.subr.mxu0 0.0
        %556 = vmatpush1.msra.mxu0 0.0
        %557 = vmatprep.subr.mxu0 0.0
        %558 = vmatpush1.msra.mxu0 0.0
        %559 = vmatprep.subr.mxu0 0.0
        %560 = vmatpush1.msra.mxu0 0.0
        %561 = vmatprep.subr.mxu0 0.0
        %562 = vmatpush1.msra.mxu0 0.0
        %563 = vmatprep.subr.mxu0 0.0
        %564 = vmatpush1.msra.mxu0 0.0
        %565 = vmatprep.subr.mxu0 0.0
        %566 = vmatpush1.msra.mxu0 0.0
        %567 = vmatprep.subr.mxu0 0.0
        %568 = vmatpush1.msra.mxu0 0.0
        %569 = vmatprep.subr.mxu0 0.0
        %570 = vmatpush1.msra.mxu0 %v209
        %571 = vmatprep.subr.mxu0 0.0
        %572 = vmatpush1.msra.mxu0 %v208
        %573 = vmatprep.subr.mxu0 0.0
        %574 = vmatpush2.msra.mxu0 0.0
        %575 = vmatprep.subr.mxu0 0.0
        %576 = vmatpush2.msra.mxu0 0.0
        %577 = vmatprep.subr.mxu0 0.0
        %578 = vmatpush2.msra.mxu0 0.0
        %579 = vmatprep.subr.mxu0 0.0
        %580 = vmatpush2.msra.mxu0 0.0
        %581 = vmatprep.subr.mxu0 0.0
        %582 = vmatpush2.msra.mxu0 0.0
        %583 = vmatprep.subr.mxu0 0.0
        %584 = vmatpush2.msra.mxu0 0.0
        %585 = vmatprep.subr.mxu0 0.0
        %586 = vmatpush2.msra.mxu0 0.0
        %587 = vmatprep.subr.mxu0 0.0
        %588 = vmatpush2.msra.mxu0 0.0
        %589 = vmatprep.subr.mxu0 0.0
        %590 = vmatpush2.msra.mxu0 0.0
        %591 = vmatprep.subr.mxu0 0.0
        %592 = vmatpush2.msra.mxu0 0.0
        %593 = vmatprep.subr.mxu0 0.0
        %594 = vmatpush2.msra.mxu0 0.0
        %595 = vmatprep.subr.mxu0 0.0
        %596 = vmatpush2.msra.mxu0 0.0
        %597 = vmatprep.subr.mxu0 0.0
        %598 = vmatpush2.msra.mxu0 0.0
        %599 = vmatprep.subr.mxu0 0.0
        %600 = vmatpush2.msra.mxu0 0.0
        %601 = vmatprep.subr.mxu0 0.0
        %602 = vmatpush2.msra.mxu0 0.0
        %603 = vmatprep.subr.mxu0 0.0
        %604 = vmatpush2.msra.mxu0 0.0
        %605 = vmatprep.mubr.f32.mxu0 0.0
        %606 = vmatmul.mubr.f32.gmra.mxu0 %v539
        %v607 = vpop.f32.mrf.mxu0
        %v608 = vadd.f32 0.0, %v607
        %v609 = vpop.f32.mrf.mxu0
        %610 = vdwg.mxu0
        %v613 = vunpack.c.l.s4 1966171168
        %v614 = vunpack.c.0.s8 %v613
        %v615 = vlaneseq
        %v616 = vshrl.u32 %v615, 7
        %v617 = vsub.s32 %v614, %v616
        %v618 = vrot.slane %v608, %v617
        %v619 = vcombine.high %v618, %v618
        %v621 = vunpack.c.l.s4 1966171168
        %v622 = vunpack.c.0.s8 %v621
        %v623 = vlaneseq
        %v624 = vshrl.u32 %v623, 7
        %v625 = vsub.s32 %v622, %v624
        %v626 = vrot.slane %v618, %v625
        %v628 = vunpack.c.l.s4 1966171168
        %v629 = vunpack.c.0.s8 %v628
        %v630 = vlaneseq
        %v631 = vshrl.u32 %v630, 7
        %v632 = vsub.s32 %v629, %v631
        %v633 = vrot.slane %v619, %v632
        %v634 = vcombine.high %v626, %v626
        %v635 = vcombine.high %v633, %v633
        %640 = vst.msk [vmem:[%s166 + $0x2] sm:$0x1] %vm353, %v626
        %641 = vst.msk [vmem:[%s166 + $0x12] sm:$0x1] %vm353, %v633
        %642 = vst.msk [vmem:[%s166 + $0x22] sm:$0x1] %vm353, %v634
        %643 = vst.msk [vmem:[%s166 + $0x32] sm:$0x1] %vm353, %v635
        %v644 = vld [vmem:[%s132 + $0x3] sm:$0x1]
        %v645 = vld [vmem:[%s132 + $0x13] sm:$0x1]
        %v646 = vld [vmem:[%s132 + $0x23] sm:$0x1]
        %v647 = vld [vmem:[%s132 + $0x33] sm:$0x1]
        %v648 = vld [vmem:[%s132 + $0x4] sm:$0x1]
        %v649 = vld [vmem:[%s132 + $0x14] sm:$0x1]
        %v650 = vld [vmem:[%s132 + $0x24] sm:$0x1]
        %v651 = vld [vmem:[%s132 + $0x34] sm:$0x1]
        %v652 = vadd.f32 %v644, %v648
        %v653 = vadd.f32 %v645, %v649
        %v654 = vadd.f32 %v646, %v650
        %v655 = vadd.f32 %v647, %v651
        %v656 = vld [vmem:[%s132 + $0x5] sm:$0x1]
        %v657 = vld [vmem:[%s132 + $0x15] sm:$0x1]
        %v658 = vld [vmem:[%s132 + $0x25] sm:$0x1]
        %v659 = vld [vmem:[%s132 + $0x35] sm:$0x1]
        %v660 = vadd.f32 %v652, %v656
        %v661 = vadd.f32 %v653, %v657
        %v662 = vadd.f32 %v654, %v658
        %v663 = vadd.f32 %v655, %v659
        %v664 = vld [vmem:[%s132 + $0x6] sm:$0x1]
        %v665 = vld [vmem:[%s132 + $0x16] sm:$0x1]
        %v666 = vld [vmem:[%s132 + $0x26] sm:$0x1]
        %v667 = vld [vmem:[%s132 + $0x36] sm:$0x1]
        %v668 = vadd.f32 %v660, %v664
        %v669 = vadd.f32 %v661, %v665
        %v670 = vadd.f32 %v662, %v666
        %v671 = vadd.f32 %v663, %v667
        %v676 = vrot.slane %v669, 7
        %v677 = vsel %vm243, %v676, %v668
        %v678 = vrot.slane %v670, 6
        %v679 = vsel %vm246, %v678, %v677
        %v680 = vrot.slane %v671, 5
        %v681 = vsel %vm249, %v680, %v679
        %v682 = vsel %vm251, %v681, 0
        %684 = vmatprep.subr.mxu0 0.0
        %685 = vmatpush1.msra.mxu0 0.0
        %686 = vmatprep.subr.mxu0 0.0
        %687 = vmatpush1.msra.mxu0 0.0
        %688 = vmatprep.subr.mxu0 0.0
        %689 = vmatpush1.msra.mxu0 0.0
        %690 = vmatprep.subr.mxu0 0.0
        %691 = vmatpush1.msra.mxu0 0.0
        %692 = vmatprep.subr.mxu0 0.0
        %693 = vmatpush1.msra.mxu0 0.0
        %694 = vmatprep.subr.mxu0 0.0
        %695 = vmatpush1.msra.mxu0 0.0
        %696 = vmatprep.subr.mxu0 0.0
        %697 = vmatpush1.msra.mxu0 0.0
        %698 = vmatprep.subr.mxu0 0.0
        %699 = vmatpush1.msra.mxu0 0.0
        %700 = vmatprep.subr.mxu0 0.0
        %701 = vmatpush1.msra.mxu0 0.0
        %702 = vmatprep.subr.mxu0 0.0
        %703 = vmatpush1.msra.mxu0 0.0
        %704 = vmatprep.subr.mxu0 0.0
        %705 = vmatpush1.msra.mxu0 0.0
        %706 = vmatprep.subr.mxu0 0.0
        %707 = vmatpush1.msra.mxu0 0.0
        %708 = vmatprep.subr.mxu0 0.0
        %709 = vmatpush1.msra.mxu0 0.0
        %710 = vmatprep.subr.mxu0 0.0
        %711 = vmatpush1.msra.mxu0 0.0
        %712 = vmatprep.subr.mxu0 0.0
        %713 = vmatpush1.msra.mxu0 %v209
        %714 = vmatprep.subr.mxu0 0.0
        %715 = vmatpush1.msra.mxu0 %v208
        %716 = vmatprep.subr.mxu0 0.0
        %717 = vmatpush2.msra.mxu0 0.0
        %718 = vmatprep.subr.mxu0 0.0
        %719 = vmatpush2.msra.mxu0 0.0
        %720 = vmatprep.subr.mxu0 0.0
        %721 = vmatpush2.msra.mxu0 0.0
        %722 = vmatprep.subr.mxu0 0.0
        %723 = vmatpush2.msra.mxu0 0.0
        %724 = vmatprep.subr.mxu0 0.0
        %725 = vmatpush2.msra.mxu0 0.0
        %726 = vmatprep.subr.mxu0 0.0
        %727 = vmatpush2.msra.mxu0 0.0
        %728 = vmatprep.subr.mxu0 0.0
        %729 = vmatpush2.msra.mxu0 0.0
        %730 = vmatprep.subr.mxu0 0.0
        %731 = vmatpush2.msra.mxu0 0.0
        %732 = vmatprep.subr.mxu0 0.0
        %733 = vmatpush2.msra.mxu0 0.0
        %734 = vmatprep.subr.mxu0 0.0
        %735 = vmatpush2.msra.mxu0 0.0
        %736 = vmatprep.subr.mxu0 0.0
        %737 = vmatpush2.msra.mxu0 0.0
        %738 = vmatprep.subr.mxu0 0.0
        %739 = vmatpush2.msra.mxu0 0.0
        %740 = vmatprep.subr.mxu0 0.0
        %741 = vmatpush2.msra.mxu0 0.0
        %742 = vmatprep.subr.mxu0 0.0
        %743 = vmatpush2.msra.mxu0 0.0
        %744 = vmatprep.subr.mxu0 0.0
        %745 = vmatpush2.msra.mxu0 0.0
        %746 = vmatprep.subr.mxu0 0.0
        %747 = vmatpush2.msra.mxu0 0.0
        %748 = vmatprep.mubr.f32.mxu0 0.0
        %749 = vmatmul.mubr.f32.gmra.mxu0 %v682
        %v750 = vpop.f32.mrf.mxu0
        %v751 = vadd.f32 0.0, %v750
        %v752 = vpop.f32.mrf.mxu0
        %753 = vdwg.mxu0
        %v756 = vunpack.c.l.s4 1966171168
        %v757 = vunpack.c.0.s8 %v756
        %v758 = vlaneseq
        %v759 = vshrl.u32 %v758, 7
        %v760 = vsub.s32 %v757, %v759
        %v761 = vrot.slane %v751, %v760
        %v762 = vcombine.high %v761, %v761
        %v764 = vunpack.c.l.s4 1966171168
        %v765 = vunpack.c.0.s8 %v764
        %v766 = vlaneseq
        %v767 = vshrl.u32 %v766, 7
        %v768 = vsub.s32 %v765, %v767
        %v769 = vrot.slane %v761, %v768
        %v771 = vunpack.c.l.s4 1966171168
        %v772 = vunpack.c.0.s8 %v771
        %v773 = vlaneseq
        %v774 = vshrl.u32 %v773, 7
        %v775 = vsub.s32 %v772, %v774
        %v776 = vrot.slane %v762, %v775
        %v777 = vcombine.high %v769, %v769
        %v778 = vcombine.high %v776, %v776
        %783 = vst.msk [vmem:[%s166 + $0x3] sm:$0x1] %vm353, %v769
        %784 = vst.msk [vmem:[%s166 + $0x13] sm:$0x1] %vm353, %v776
        %785 = vst.msk [vmem:[%s166 + $0x23] sm:$0x1] %vm353, %v777
        %786 = vst.msk [vmem:[%s166 + $0x33] sm:$0x1] %vm353, %v778
        %v787 = vld [vmem:[%s132 + $0x4] sm:$0x1]
        %v788 = vld [vmem:[%s132 + $0x14] sm:$0x1]
        %v789 = vld [vmem:[%s132 + $0x24] sm:$0x1]
        %v790 = vld [vmem:[%s132 + $0x34] sm:$0x1]
        %v791 = vld [vmem:[%s132 + $0x5] sm:$0x1]
        %v792 = vld [vmem:[%s132 + $0x15] sm:$0x1]
        %v793 = vld [vmem:[%s132 + $0x25] sm:$0x1]
        %v794 = vld [vmem:[%s132 + $0x35] sm:$0x1]
        %v795 = vadd.f32 %v787, %v791
        %v796 = vadd.f32 %v788, %v792
        %v797 = vadd.f32 %v789, %v793
        %v798 = vadd.f32 %v790, %v794
        %v799 = vld [vmem:[%s132 + $0x6] sm:$0x1]
        %v800 = vld [vmem:[%s132 + $0x16] sm:$0x1]
        %v801 = vld [vmem:[%s132 + $0x26] sm:$0x1]
        %v802 = vld [vmem:[%s132 + $0x36] sm:$0x1]
        %v803 = vadd.f32 %v795, %v799
        %v804 = vadd.f32 %v796, %v800
        %v805 = vadd.f32 %v797, %v801
        %v806 = vadd.f32 %v798, %v802
        %v807 = vld [vmem:[%s132 + $0x7] sm:$0x1]
        %v808 = vld [vmem:[%s132 + $0x17] sm:$0x1]
        %v809 = vld [vmem:[%s132 + $0x27] sm:$0x1]
        %v810 = vld [vmem:[%s132 + $0x37] sm:$0x1]
        %v811 = vadd.f32 %v803, %v807
        %v812 = vadd.f32 %v804, %v808
        %v813 = vadd.f32 %v805, %v809
        %v814 = vadd.f32 %v806, %v810
        %v819 = vrot.slane %v812, 7
        %v820 = vsel %vm243, %v819, %v811
        %v821 = vrot.slane %v813, 6
        %v822 = vsel %vm246, %v821, %v820
        %v823 = vrot.slane %v814, 5
        %v824 = vsel %vm249, %v823, %v822
        %v825 = vsel %vm251, %v824, 0
        %827 = vmatprep.subr.mxu0 0.0
        %828 = vmatpush1.msra.mxu0 0.0
        %829 = vmatprep.subr.mxu0 0.0
        %830 = vmatpush1.msra.mxu0 0.0
        %831 = vmatprep.subr.mxu0 0.0
        %832 = vmatpush1.msra.mxu0 0.0
        %833 = vmatprep.subr.mxu0 0.0
        %834 = vmatpush1.msra.mxu0 0.0
        %835 = vmatprep.subr.mxu0 0.0
        %836 = vmatpush1.msra.mxu0 0.0
        %837 = vmatprep.subr.mxu0 0.0
        %838 = vmatpush1.msra.mxu0 0.0
        %839 = vmatprep.subr.mxu0 0.0
        %840 = vmatpush1.msra.mxu0 0.0
        %841 = vmatprep.subr.mxu0 0.0
        %842 = vmatpush1.msra.mxu0 0.0
        %843 = vmatprep.subr.mxu0 0.0
        %844 = vmatpush1.msra.mxu0 0.0
        %845 = vmatprep.subr.mxu0 0.0
        %846 = vmatpush1.msra.mxu0 0.0
        %847 = vmatprep.subr.mxu0 0.0
        %848 = vmatpush1.msra.mxu0 0.0
        %849 = vmatprep.subr.mxu0 0.0
        %850 = vmatpush1.msra.mxu0 0.0
        %851 = vmatprep.subr.mxu0 0.0
        %852 = vmatpush1.msra.mxu0 0.0
        %853 = vmatprep.subr.mxu0 0.0
        %854 = vmatpush1.msra.mxu0 0.0
        %855 = vmatprep.subr.mxu0 0.0
        %856 = vmatpush1.msra.mxu0 %v209
        %857 = vmatprep.subr.mxu0 0.0
        %858 = vmatpush1.msra.mxu0 %v208
        %859 = vmatprep.subr.mxu0 0.0
        %860 = vmatpush2.msra.mxu0 0.0
        %861 = vmatprep.subr.mxu0 0.0
        %862 = vmatpush2.msra.mxu0 0.0
        %863 = vmatprep.subr.mxu0 0.0
        %864 = vmatpush2.msra.mxu0 0.0
        %865 = vmatprep.subr.mxu0 0.0
        %866 = vmatpush2.msra.mxu0 0.0
        %867 = vmatprep.subr.mxu0 0.0
        %868 = vmatpush2.msra.mxu0 0.0
        %869 = vmatprep.subr.mxu0 0.0
        %870 = vmatpush2.msra.mxu0 0.0
        %871 = vmatprep.subr.mxu0 0.0
        %872 = vmatpush2.msra.mxu0 0.0
        %873 = vmatprep.subr.mxu0 0.0
        %874 = vmatpush2.msra.mxu0 0.0
        %875 = vmatprep.subr.mxu0 0.0
        %876 = vmatpush2.msra.mxu0 0.0
        %877 = vmatprep.subr.mxu0 0.0
        %878 = vmatpush2.msra.mxu0 0.0
        %879 = vmatprep.subr.mxu0 0.0
        %880 = vmatpush2.msra.mxu0 0.0
        %881 = vmatprep.subr.mxu0 0.0
        %882 = vmatpush2.msra.mxu0 0.0
        %883 = vmatprep.subr.mxu0 0.0
        %884 = vmatpush2.msra.mxu0 0.0
        %885 = vmatprep.subr.mxu0 0.0
        %886 = vmatpush2.msra.mxu0 0.0
        %887 = vmatprep.subr.mxu0 0.0
        %888 = vmatpush2.msra.mxu0 0.0
        %889 = vmatprep.subr.mxu0 0.0
        %890 = vmatpush2.msra.mxu0 0.0
        %891 = vmatprep.mubr.f32.mxu0 0.0
        %892 = vmatmul.mubr.f32.gmra.mxu0 %v825
        %v893 = vpop.f32.mrf.mxu0
        %v894 = vadd.f32 0.0, %v893
        %v895 = vpop.f32.mrf.mxu0
        %896 = vdwg.mxu0
        %v899 = vunpack.c.l.s4 1966171168
        %v900 = vunpack.c.0.s8 %v899
        %v901 = vlaneseq
        %v902 = vshrl.u32 %v901, 7
        %v903 = vsub.s32 %v900, %v902
        %v904 = vrot.slane %v894, %v903
        %v905 = vcombine.high %v904, %v904
        %v907 = vunpack.c.l.s4 1966171168
        %v908 = vunpack.c.0.s8 %v907
        %v909 = vlaneseq
        %v910 = vshrl.u32 %v909, 7
        %v911 = vsub.s32 %v908, %v910
        %v912 = vrot.slane %v904, %v911
        %v914 = vunpack.c.l.s4 1966171168
        %v915 = vunpack.c.0.s8 %v914
        %v916 = vlaneseq
        %v917 = vshrl.u32 %v916, 7
        %v918 = vsub.s32 %v915, %v917
        %v919 = vrot.slane %v905, %v918
        %v920 = vcombine.high %v912, %v912
        %v921 = vcombine.high %v919, %v919
        %926 = vst.msk [vmem:[%s166 + $0x4] sm:$0x1] %vm353, %v912
        %927 = vst.msk [vmem:[%s166 + $0x14] sm:$0x1] %vm353, %v919
        %928 = vst.msk [vmem:[%s166 + $0x24] sm:$0x1] %vm353, %v920
        %929 = vst.msk [vmem:[%s166 + $0x34] sm:$0x1] %vm353, %v921
        %v930 = vld [vmem:[%s132 + $0x5] sm:$0x1]
        %v931 = vld [vmem:[%s132 + $0x15] sm:$0x1]
        %v932 = vld [vmem:[%s132 + $0x25] sm:$0x1]
        %v933 = vld [vmem:[%s132 + $0x35] sm:$0x1]
        %v934 = vld [vmem:[%s132 + $0x6] sm:$0x1]
        %v935 = vld [vmem:[%s132 + $0x16] sm:$0x1]
        %v936 = vld [vmem:[%s132 + $0x26] sm:$0x1]
        %v937 = vld [vmem:[%s132 + $0x36] sm:$0x1]
        %v938 = vadd.f32 %v930, %v934
        %v939 = vadd.f32 %v931, %v935
        %v940 = vadd.f32 %v932, %v936
        %v941 = vadd.f32 %v933, %v937
        %v942 = vld [vmem:[%s132 + $0x7] sm:$0x1]
        %v943 = vld [vmem:[%s132 + $0x17] sm:$0x1]
        %v944 = vld [vmem:[%s132 + $0x27] sm:$0x1]
        %v945 = vld [vmem:[%s132 + $0x37] sm:$0x1]
        %v946 = vadd.f32 %v938, %v942
        %v947 = vadd.f32 %v939, %v943
        %v948 = vadd.f32 %v940, %v944
        %v949 = vadd.f32 %v941, %v945
        %v950 = vld [vmem:[%s132 + $0x8] sm:$0x1]
        %v951 = vld [vmem:[%s132 + $0x18] sm:$0x1]
        %v952 = vld [vmem:[%s132 + $0x28] sm:$0x1]
        %v953 = vld [vmem:[%s132 + $0x38] sm:$0x1]
        %v954 = vadd.f32 %v946, %v950
        %v955 = vadd.f32 %v947, %v951
        %v956 = vadd.f32 %v948, %v952
        %v957 = vadd.f32 %v949, %v953
        %v962 = vrot.slane %v955, 7
        %v963 = vsel %vm243, %v962, %v954
        %v964 = vrot.slane %v956, 6
        %v965 = vsel %vm246, %v964, %v963
        %v966 = vrot.slane %v957, 5
        %v967 = vsel %vm249, %v966, %v965
        %v968 = vsel %vm251, %v967, 0
        %970 = vmatprep.subr.mxu0 0.0
        %971 = vmatpush1.msra.mxu0 0.0
        %972 = vmatprep.subr.mxu0 0.0
        %973 = vmatpush1.msra.mxu0 0.0
        %974 = vmatprep.subr.mxu0 0.0
        %975 = vmatpush1.msra.mxu0 0.0
        %976 = vmatprep.subr.mxu0 0.0
        %977 = vmatpush1.msra.mxu0 0.0
        %978 = vmatprep.subr.mxu0 0.0
        %979 = vmatpush1.msra.mxu0 0.0
        %980 = vmatprep.subr.mxu0 0.0
        %981 = vmatpush1.msra.mxu0 0.0
        %982 = vmatprep.subr.mxu0 0.0
        %983 = vmatpush1.msra.mxu0 0.0
        %984 = vmatprep.subr.mxu0 0.0
        %985 = vmatpush1.msra.mxu0 0.0
        %986 = vmatprep.subr.mxu0 0.0
        %987 = vmatpush1.msra.mxu0 0.0
        %988 = vmatprep.subr.mxu0 0.0
        %989 = vmatpush1.msra.mxu0 0.0
        %990 = vmatprep.subr.mxu0 0.0
        %991 = vmatpush1.msra.mxu0 0.0
        %992 = vmatprep.subr.mxu0 0.0
        %993 = vmatpush1.msra.mxu0 0.0
        %994 = vmatprep.subr.mxu0 0.0
        %995 = vmatpush1.msra.mxu0 0.0
        %996 = vmatprep.subr.mxu0 0.0
        %997 = vmatpush1.msra.mxu0 0.0
        %998 = vmatprep.subr.mxu0 0.0
        %999 = vmatpush1.msra.mxu0 %v209
        %1000 = vmatprep.subr.mxu0 0.0
        %1001 = vmatpush1.msra.mxu0 %v208
        %1002 = vmatprep.subr.mxu0 0.0
        %1003 = vmatpush2.msra.mxu0 0.0
        %1004 = vmatprep.subr.mxu0 0.0
        %1005 = vmatpush2.msra.mxu0 0.0
        %1006 = vmatprep.subr.mxu0 0.0
        %1007 = vmatpush2.msra.mxu0 0.0
        %1008 = vmatprep.subr.mxu0 0.0
        %1009 = vmatpush2.msra.mxu0 0.0
        %1010 = vmatprep.subr.mxu0 0.0
        %1011 = vmatpush2.msra.mxu0 0.0
        %1012 = vmatprep.subr.mxu0 0.0
        %1013 = vmatpush2.msra.mxu0 0.0
        %1014 = vmatprep.subr.mxu0 0.0
        %1015 = vmatpush2.msra.mxu0 0.0
        %1016 = vmatprep.subr.mxu0 0.0
        %1017 = vmatpush2.msra.mxu0 0.0
        %1018 = vmatprep.subr.mxu0 0.0
        %1019 = vmatpush2.msra.mxu0 0.0
        %1020 = vmatprep.subr.mxu0 0.0
        %1021 = vmatpush2.msra.mxu0 0.0
        %1022 = vmatprep.subr.mxu0 0.0
        %1023 = vmatpush2.msra.mxu0 0.0
        %1024 = vmatprep.subr.mxu0 0.0
        %1025 = vmatpush2.msra.mxu0 0.0
        %1026 = vmatprep.subr.mxu0 0.0
        %1027 = vmatpush2.msra.mxu0 0.0
        %1028 = vmatprep.subr.mxu0 0.0
        %1029 = vmatpush2.msra.mxu0 0.0
        %1030 = vmatprep.subr.mxu0 0.0
        %1031 = vmatpush2.msra.mxu0 0.0
        %1032 = vmatprep.subr.mxu0 0.0
        %1033 = vmatpush2.msra.mxu0 0.0
        %1034 = vmatprep.mubr.f32.mxu0 0.0
        %1035 = vmatmul.mubr.f32.gmra.mxu0 %v968
        %v1036 = vpop.f32.mrf.mxu0
        %v1037 = vadd.f32 0.0, %v1036
        %v1038 = vpop.f32.mrf.mxu0
        %1039 = vdwg.mxu0
        %v1042 = vunpack.c.l.s4 1966171168
        %v1043 = vunpack.c.0.s8 %v1042
        %v1044 = vlaneseq
        %v1045 = vshrl.u32 %v1044, 7
        %v1046 = vsub.s32 %v1043, %v1045
        %v1047 = vrot.slane %v1037, %v1046
        %v1048 = vcombine.high %v1047, %v1047
        %v1050 = vunpack.c.l.s4 1966171168
        %v1051 = vunpack.c.0.s8 %v1050
        %v1052 = vlaneseq
        %v1053 = vshrl.u32 %v1052, 7
        %v1054 = vsub.s32 %v1051, %v1053
        %v1055 = vrot.slane %v1047, %v1054
        %v1057 = vunpack.c.l.s4 1966171168
        %v1058 = vunpack.c.0.s8 %v1057
        %v1059 = vlaneseq
        %v1060 = vshrl.u32 %v1059, 7
        %v1061 = vsub.s32 %v1058, %v1060
        %v1062 = vrot.slane %v1048, %v1061
        %v1063 = vcombine.high %v1055, %v1055
        %v1064 = vcombine.high %v1062, %v1062
        %1069 = vst.msk [vmem:[%s166 + $0x5] sm:$0x1] %vm353, %v1055
        %1070 = vst.msk [vmem:[%s166 + $0x15] sm:$0x1] %vm353, %v1062
        %1071 = vst.msk [vmem:[%s166 + $0x25] sm:$0x1] %vm353, %v1063
        %1072 = vst.msk [vmem:[%s166 + $0x35] sm:$0x1] %vm353, %v1064
        %v1073 = vld [vmem:[%s132 + $0x6] sm:$0x1]
        %v1074 = vld [vmem:[%s132 + $0x16] sm:$0x1]
        %v1075 = vld [vmem:[%s132 + $0x26] sm:$0x1]
        %v1076 = vld [vmem:[%s132 + $0x36] sm:$0x1]
        %v1077 = vld [vmem:[%s132 + $0x7] sm:$0x1]
        %v1078 = vld [vmem:[%s132 + $0x17] sm:$0x1]
        %v1079 = vld [vmem:[%s132 + $0x27] sm:$0x1]
        %v1080 = vld [vmem:[%s132 + $0x37] sm:$0x1]
        %v1081 = vadd.f32 %v1073, %v1077
        %v1082 = vadd.f32 %v1074, %v1078
        %v1083 = vadd.f32 %v1075, %v1079
        %v1084 = vadd.f32 %v1076, %v1080
        %v1085 = vld [vmem:[%s132 + $0x8] sm:$0x1]
        %v1086 = vld [vmem:[%s132 + $0x18] sm:$0x1]
        %v1087 = vld [vmem:[%s132 + $0x28] sm:$0x1]
        %v1088 = vld [vmem:[%s132 + $0x38] sm:$0x1]
        %v1089 = vadd.f32 %v1081, %v1085
        %v1090 = vadd.f32 %v1082, %v1086
        %v1091 = vadd.f32 %v1083, %v1087
        %v1092 = vadd.f32 %v1084, %v1088
        %v1093 = vld [vmem:[%s132 + $0x9] sm:$0x1]
        %v1094 = vld [vmem:[%s132 + $0x19] sm:$0x1]
        %v1095 = vld [vmem:[%s132 + $0x29] sm:$0x1]
        %v1096 = vld [vmem:[%s132 + $0x39] sm:$0x1]
        %v1097 = vadd.f32 %v1089, %v1093
        %v1098 = vadd.f32 %v1090, %v1094
        %v1099 = vadd.f32 %v1091, %v1095
        %v1100 = vadd.f32 %v1092, %v1096
        %v1105 = vrot.slane %v1098, 7
        %v1106 = vsel %vm243, %v1105, %v1097
        %v1107 = vrot.slane %v1099, 6
        %v1108 = vsel %vm246, %v1107, %v1106
        %v1109 = vrot.slane %v1100, 5
        %v1110 = vsel %vm249, %v1109, %v1108
        %v1111 = vsel %vm251, %v1110, 0
        %1113 = vmatprep.subr.mxu0 0.0
        %1114 = vmatpush1.msra.mxu0 0.0
        %1115 = vmatprep.subr.mxu0 0.0
        %1116 = vmatpush1.msra.mxu0 0.0
        %1117 = vmatprep.subr.mxu0 0.0
        %1118 = vmatpush1.msra.mxu0 0.0
        %1119 = vmatprep.subr.mxu0 0.0
        %1120 = vmatpush1.msra.mxu0 0.0
        %1121 = vmatprep.subr.mxu0 0.0
        %1122 = vmatpush1.msra.mxu0 0.0
        %1123 = vmatprep.subr.mxu0 0.0
        %1124 = vmatpush1.msra.mxu0 0.0
        %1125 = vmatprep.subr.mxu0 0.0
        %1126 = vmatpush1.msra.mxu0 0.0
        %1127 = vmatprep.subr.mxu0 0.0
        %1128 = vmatpush1.msra.mxu0 0.0
        %1129 = vmatprep.subr.mxu0 0.0
        %1130 = vmatpush1.msra.mxu0 0.0
        %1131 = vmatprep.subr.mxu0 0.0
        %1132 = vmatpush1.msra.mxu0 0.0
        %1133 = vmatprep.subr.mxu0 0.0
        %1134 = vmatpush1.msra.mxu0 0.0
        %1135 = vmatprep.subr.mxu0 0.0
        %1136 = vmatpush1.msra.mxu0 0.0
        %1137 = vmatprep.subr.mxu0 0.0
        %1138 = vmatpush1.msra.mxu0 0.0
        %1139 = vmatprep.subr.mxu0 0.0
        %1140 = vmatpush1.msra.mxu0 0.0
        %1141 = vmatprep.subr.mxu0 0.0
        %1142 = vmatpush1.msra.mxu0 %v209
        %1143 = vmatprep.subr.mxu0 0.0
        %1144 = vmatpush1.msra.mxu0 %v208
        %1145 = vmatprep.subr.mxu0 0.0
        %1146 = vmatpush2.msra.mxu0 0.0
        %1147 = vmatprep.subr.mxu0 0.0
        %1148 = vmatpush2.msra.mxu0 0.0
        %1149 = vmatprep.subr.mxu0 0.0
        %1150 = vmatpush2.msra.mxu0 0.0
        %1151 = vmatprep.subr.mxu0 0.0
        %1152 = vmatpush2.msra.mxu0 0.0
        %1153 = vmatprep.subr.mxu0 0.0
        %1154 = vmatpush2.msra.mxu0 0.0
        %1155 = vmatprep.subr.mxu0 0.0
        %1156 = vmatpush2.msra.mxu0 0.0
        %1157 = vmatprep.subr.mxu0 0.0
        %1158 = vmatpush2.msra.mxu0 0.0
        %1159 = vmatprep.subr.mxu0 0.0
        %1160 = vmatpush2.msra.mxu0 0.0
        %1161 = vmatprep.subr.mxu0 0.0
        %1162 = vmatpush2.msra.mxu0 0.0
        %1163 = vmatprep.subr.mxu0 0.0
        %1164 = vmatpush2.msra.mxu0 0.0
        %1165 = vmatprep.subr.mxu0 0.0
        %1166 = vmatpush2.msra.mxu0 0.0
        %1167 = vmatprep.subr.mxu0 0.0
        %1168 = vmatpush2.msra.mxu0 0.0
        %1169 = vmatprep.subr.mxu0 0.0
        %1170 = vmatpush2.msra.mxu0 0.0
        %1171 = vmatprep.subr.mxu0 0.0
        %1172 = vmatpush2.msra.mxu0 0.0
        %1173 = vmatprep.subr.mxu0 0.0
        %1174 = vmatpush2.msra.mxu0 0.0
        %1175 = vmatprep.subr.mxu0 0.0
        %1176 = vmatpush2.msra.mxu0 0.0
        %1177 = vmatprep.mubr.f32.mxu0 0.0
        %1178 = vmatmul.mubr.f32.gmra.mxu0 %v1111
        %v1179 = vpop.f32.mrf.mxu0
        %v1180 = vadd.f32 0.0, %v1179
        %v1181 = vpop.f32.mrf.mxu0
        %1182 = vdwg.mxu0
        %v1185 = vunpack.c.l.s4 1966171168
        %v1186 = vunpack.c.0.s8 %v1185
        %v1187 = vlaneseq
        %v1188 = vshrl.u32 %v1187, 7
        %v1189 = vsub.s32 %v1186, %v1188
        %v1190 = vrot.slane %v1180, %v1189
        %v1191 = vcombine.high %v1190, %v1190
        %v1193 = vunpack.c.l.s4 1966171168
        %v1194 = vunpack.c.0.s8 %v1193
        %v1195 = vlaneseq
        %v1196 = vshrl.u32 %v1195, 7
        %v1197 = vsub.s32 %v1194, %v1196
        %v1198 = vrot.slane %v1190, %v1197
        %v1200 = vunpack.c.l.s4 1966171168
        %v1201 = vunpack.c.0.s8 %v1200
        %v1202 = vlaneseq
        %v1203 = vshrl.u32 %v1202, 7
        %v1204 = vsub.s32 %v1201, %v1203
        %v1205 = vrot.slane %v1191, %v1204
        %v1206 = vcombine.high %v1198, %v1198
        %v1207 = vcombine.high %v1205, %v1205
        %1212 = vst.msk [vmem:[%s166 + $0x6] sm:$0x1] %vm353, %v1198
        %1213 = vst.msk [vmem:[%s166 + $0x16] sm:$0x1] %vm353, %v1205
        %1214 = vst.msk [vmem:[%s166 + $0x26] sm:$0x1] %vm353, %v1206
        %1215 = vst.msk [vmem:[%s166 + $0x36] sm:$0x1] %vm353, %v1207
        %v1216 = vld [vmem:[%s132 + $0x7] sm:$0x1]
        %v1217 = vld [vmem:[%s132 + $0x17] sm:$0x1]
        %v1218 = vld [vmem:[%s132 + $0x27] sm:$0x1]
        %v1219 = vld [vmem:[%s132 + $0x37] sm:$0x1]
        %v1220 = vld [vmem:[%s132 + $0x8] sm:$0x1]
        %v1221 = vld [vmem:[%s132 + $0x18] sm:$0x1]
        %v1222 = vld [vmem:[%s132 + $0x28] sm:$0x1]
        %v1223 = vld [vmem:[%s132 + $0x38] sm:$0x1]
        %v1224 = vadd.f32 %v1216, %v1220
        %v1225 = vadd.f32 %v1217, %v1221
        %v1226 = vadd.f32 %v1218, %v1222
        %v1227 = vadd.f32 %v1219, %v1223
        %v1228 = vld [vmem:[%s132 + $0x9] sm:$0x1]
        %v1229 = vld [vmem:[%s132 + $0x19] sm:$0x1]
        %v1230 = vld [vmem:[%s132 + $0x29] sm:$0x1]
        %v1231 = vld [vmem:[%s132 + $0x39] sm:$0x1]
        %v1232 = vadd.f32 %v1224, %v1228
        %v1233 = vadd.f32 %v1225, %v1229
        %v1234 = vadd.f32 %v1226, %v1230
        %v1235 = vadd.f32 %v1227, %v1231
        %v1236 = vld [vmem:[%s132 + $0xa] sm:$0x1]
        %v1237 = vld [vmem:[%s132 + $0x1a] sm:$0x1]
        %v1238 = vld [vmem:[%s132 + $0x2a] sm:$0x1]
        %v1239 = vld [vmem:[%s132 + $0x3a] sm:$0x1]
        %v1240 = vadd.f32 %v1232, %v1236
        %v1241 = vadd.f32 %v1233, %v1237
        %v1242 = vadd.f32 %v1234, %v1238
        %v1243 = vadd.f32 %v1235, %v1239
        %v1248 = vrot.slane %v1241, 7
        %v1249 = vsel %vm243, %v1248, %v1240
        %v1250 = vrot.slane %v1242, 6
        %v1251 = vsel %vm246, %v1250, %v1249
        %v1252 = vrot.slane %v1243, 5
        %v1253 = vsel %vm249, %v1252, %v1251
        %v1254 = vsel %vm251, %v1253, 0
        %1256 = vmatprep.subr.mxu0 0.0
        %1257 = vmatpush1.msra.mxu0 0.0
        %1258 = vmatprep.subr.mxu0 0.0
        %1259 = vmatpush1.msra.mxu0 0.0
        %1260 = vmatprep.subr.mxu0 0.0
        %1261 = vmatpush1.msra.mxu0 0.0
        %1262 = vmatprep.subr.mxu0 0.0
        %1263 = vmatpush1.msra.mxu0 0.0
        %1264 = vmatprep.subr.mxu0 0.0
        %1265 = vmatpush1.msra.mxu0 0.0
        %1266 = vmatprep.subr.mxu0 0.0
        %1267 = vmatpush1.msra.mxu0 0.0
        %1268 = vmatprep.subr.mxu0 0.0
        %1269 = vmatpush1.msra.mxu0 0.0
        %1270 = vmatprep.subr.mxu0 0.0
        %1271 = vmatpush1.msra.mxu0 0.0
        %1272 = vmatprep.subr.mxu0 0.0
        %1273 = vmatpush1.msra.mxu0 0.0
        %1274 = vmatprep.subr.mxu0 0.0
        %1275 = vmatpush1.msra.mxu0 0.0
        %1276 = vmatprep.subr.mxu0 0.0
        %1277 = vmatpush1.msra.mxu0 0.0
        %1278 = vmatprep.subr.mxu0 0.0
        %1279 = vmatpush1.msra.mxu0 0.0
        %1280 = vmatprep.subr.mxu0 0.0
        %1281 = vmatpush1.msra.mxu0 0.0
        %1282 = vmatprep.subr.mxu0 0.0
        %1283 = vmatpush1.msra.mxu0 0.0
        %1284 = vmatprep.subr.mxu0 0.0
        %1285 = vmatpush1.msra.mxu0 %v209
        %1286 = vmatprep.subr.mxu0 0.0
        %1287 = vmatpush1.msra.mxu0 %v208
        %1288 = vmatprep.subr.mxu0 0.0
        %1289 = vmatpush2.msra.mxu0 0.0
        %1290 = vmatprep.subr.mxu0 0.0
        %1291 = vmatpush2.msra.mxu0 0.0
        %1292 = vmatprep.subr.mxu0 0.0
        %1293 = vmatpush2.msra.mxu0 0.0
        %1294 = vmatprep.subr.mxu0 0.0
        %1295 = vmatpush2.msra.mxu0 0.0
        %1296 = vmatprep.subr.mxu0 0.0
        %1297 = vmatpush2.msra.mxu0 0.0
        %1298 = vmatprep.subr.mxu0 0.0
        %1299 = vmatpush2.msra.mxu0 0.0
        %1300 = vmatprep.subr.mxu0 0.0
        %1301 = vmatpush2.msra.mxu0 0.0
        %1302 = vmatprep.subr.mxu0 0.0
        %1303 = vmatpush2.msra.mxu0 0.0
        %1304 = vmatprep.subr.mxu0 0.0
        %1305 = vmatpush2.msra.mxu0 0.0
        %1306 = vmatprep.subr.mxu0 0.0
        %1307 = vmatpush2.msra.mxu0 0.0
        %1308 = vmatprep.subr.mxu0 0.0
        %1309 = vmatpush2.msra.mxu0 0.0
        %1310 = vmatprep.subr.mxu0 0.0
        %1311 = vmatpush2.msra.mxu0 0.0
        %1312 = vmatprep.subr.mxu0 0.0
        %1313 = vmatpush2.msra.mxu0 0.0
        %1314 = vmatprep.subr.mxu0 0.0
        %1315 = vmatpush2.msra.mxu0 0.0
        %1316 = vmatprep.subr.mxu0 0.0
        %1317 = vmatpush2.msra.mxu0 0.0
        %1318 = vmatprep.subr.mxu0 0.0
        %1319 = vmatpush2.msra.mxu0 0.0
        %1320 = vmatprep.mubr.f32.mxu0 0.0
        %1321 = vmatmul.mubr.f32.gmra.mxu0 %v1254
        %v1322 = vpop.f32.mrf.mxu0
        %v1323 = vadd.f32 0.0, %v1322
        %v1324 = vpop.f32.mrf.mxu0
        %1325 = vdwg.mxu0
        %v1328 = vunpack.c.l.s4 1966171168
        %v1329 = vunpack.c.0.s8 %v1328
        %v1330 = vlaneseq
        %v1331 = vshrl.u32 %v1330, 7
        %v1332 = vsub.s32 %v1329, %v1331
        %v1333 = vrot.slane %v1323, %v1332
        %v1334 = vcombine.high %v1333, %v1333
        %v1336 = vunpack.c.l.s4 1966171168
        %v1337 = vunpack.c.0.s8 %v1336
        %v1338 = vlaneseq
        %v1339 = vshrl.u32 %v1338, 7
        %v1340 = vsub.s32 %v1337, %v1339
        %v1341 = vrot.slane %v1333, %v1340
        %v1343 = vunpack.c.l.s4 1966171168
        %v1344 = vunpack.c.0.s8 %v1343
        %v1345 = vlaneseq
        %v1346 = vshrl.u32 %v1345, 7
        %v1347 = vsub.s32 %v1344, %v1346
        %v1348 = vrot.slane %v1334, %v1347
        %v1349 = vcombine.high %v1341, %v1341
        %v1350 = vcombine.high %v1348, %v1348
        %1355 = vst.msk [vmem:[%s166 + $0x7] sm:$0x1] %vm353, %v1341
        %1356 = vst.msk [vmem:[%s166 + $0x17] sm:$0x1] %vm353, %v1348
        %1357 = vst.msk [vmem:[%s166 + $0x27] sm:$0x1] %vm353, %v1349
        %1358 = vst.msk [vmem:[%s166 + $0x37] sm:$0x1] %vm353, %v1350
        %v1359 = vld [vmem:[%s132 + $0x8] sm:$0x1]
        %v1360 = vld [vmem:[%s132 + $0x18] sm:$0x1]
        %v1361 = vld [vmem:[%s132 + $0x28] sm:$0x1]
        %v1362 = vld [vmem:[%s132 + $0x38] sm:$0x1]
        %v1363 = vld [vmem:[%s132 + $0x9] sm:$0x1]
        %v1364 = vld [vmem:[%s132 + $0x19] sm:$0x1]
        %v1365 = vld [vmem:[%s132 + $0x29] sm:$0x1]
        %v1366 = vld [vmem:[%s132 + $0x39] sm:$0x1]
        %v1367 = vadd.f32 %v1359, %v1363
        %v1368 = vadd.f32 %v1360, %v1364
        %v1369 = vadd.f32 %v1361, %v1365
        %v1370 = vadd.f32 %v1362, %v1366
        %v1371 = vld [vmem:[%s132 + $0xa] sm:$0x1]
        %v1372 = vld [vmem:[%s132 + $0x1a] sm:$0x1]
        %v1373 = vld [vmem:[%s132 + $0x2a] sm:$0x1]
        %v1374 = vld [vmem:[%s132 + $0x3a] sm:$0x1]
        %v1375 = vadd.f32 %v1367, %v1371
        %v1376 = vadd.f32 %v1368, %v1372
        %v1377 = vadd.f32 %v1369, %v1373
        %v1378 = vadd.f32 %v1370, %v1374
        %v1379 = vld [vmem:[%s132 + $0xb] sm:$0x1]
        %v1380 = vld [vmem:[%s132 + $0x1b] sm:$0x1]
        %v1381 = vld [vmem:[%s132 + $0x2b] sm:$0x1]
        %v1382 = vld [vmem:[%s132 + $0x3b] sm:$0x1]
        %v1383 = vadd.f32 %v1375, %v1379
        %v1384 = vadd.f32 %v1376, %v1380
        %v1385 = vadd.f32 %v1377, %v1381
        %v1386 = vadd.f32 %v1378, %v1382
        %v1391 = vrot.slane %v1384, 7
        %v1392 = vsel %vm243, %v1391, %v1383
        %v1393 = vrot.slane %v1385, 6
        %v1394 = vsel %vm246, %v1393, %v1392
        %v1395 = vrot.slane %v1386, 5
        %v1396 = vsel %vm249, %v1395, %v1394
        %v1397 = vsel %vm251, %v1396, 0
        %1399 = vmatprep.subr.mxu0 0.0
        %1400 = vmatpush1.msra.mxu0 0.0
        %1401 = vmatprep.subr.mxu0 0.0
        %1402 = vmatpush1.msra.mxu0 0.0
        %1403 = vmatprep.subr.mxu0 0.0
        %1404 = vmatpush1.msra.mxu0 0.0
        %1405 = vmatprep.subr.mxu0 0.0
        %1406 = vmatpush1.msra.mxu0 0.0
        %1407 = vmatprep.subr.mxu0 0.0
        %1408 = vmatpush1.msra.mxu0 0.0
        %1409 = vmatprep.subr.mxu0 0.0
        %1410 = vmatpush1.msra.mxu0 0.0
        %1411 = vmatprep.subr.mxu0 0.0
        %1412 = vmatpush1.msra.mxu0 0.0
        %1413 = vmatprep.subr.mxu0 0.0
        %1414 = vmatpush1.msra.mxu0 0.0
        %1415 = vmatprep.subr.mxu0 0.0
        %1416 = vmatpush1.msra.mxu0 0.0
        %1417 = vmatprep.subr.mxu0 0.0
        %1418 = vmatpush1.msra.mxu0 0.0
        %1419 = vmatprep.subr.mxu0 0.0
        %1420 = vmatpush1.msra.mxu0 0.0
        %1421 = vmatprep.subr.mxu0 0.0
        %1422 = vmatpush1.msra.mxu0 0.0
        %1423 = vmatprep.subr.mxu0 0.0
        %1424 = vmatpush1.msra.mxu0 0.0
        %1425 = vmatprep.subr.mxu0 0.0
        %1426 = vmatpush1.msra.mxu0 0.0
        %1427 = vmatprep.subr.mxu0 0.0
        %1428 = vmatpush1.msra.mxu0 %v209
        %1429 = vmatprep.subr.mxu0 0.0
        %1430 = vmatpush1.msra.mxu0 %v208
        %1431 = vmatprep.subr.mxu0 0.0
        %1432 = vmatpush2.msra.mxu0 0.0
        %1433 = vmatprep.subr.mxu0 0.0
        %1434 = vmatpush2.msra.mxu0 0.0
        %1435 = vmatprep.subr.mxu0 0.0
        %1436 = vmatpush2.msra.mxu0 0.0
        %1437 = vmatprep.subr.mxu0 0.0
        %1438 = vmatpush2.msra.mxu0 0.0
        %1439 = vmatprep.subr.mxu0 0.0
        %1440 = vmatpush2.msra.mxu0 0.0
        %1441 = vmatprep.subr.mxu0 0.0
        %1442 = vmatpush2.msra.mxu0 0.0
        %1443 = vmatprep.subr.mxu0 0.0
        %1444 = vmatpush2.msra.mxu0 0.0
        %1445 = vmatprep.subr.mxu0 0.0
        %1446 = vmatpush2.msra.mxu0 0.0
        %1447 = vmatprep.subr.mxu0 0.0
        %1448 = vmatpush2.msra.mxu0 0.0
        %1449 = vmatprep.subr.mxu0 0.0
        %1450 = vmatpush2.msra.mxu0 0.0
        %1451 = vmatprep.subr.mxu0 0.0
        %1452 = vmatpush2.msra.mxu0 0.0
        %1453 = vmatprep.subr.mxu0 0.0
        %1454 = vmatpush2.msra.mxu0 0.0
        %1455 = vmatprep.subr.mxu0 0.0
        %1456 = vmatpush2.msra.mxu0 0.0
        %1457 = vmatprep.subr.mxu0 0.0
        %1458 = vmatpush2.msra.mxu0 0.0
        %1459 = vmatprep.subr.mxu0 0.0
        %1460 = vmatpush2.msra.mxu0 0.0
        %1461 = vmatprep.subr.mxu0 0.0
        %1462 = vmatpush2.msra.mxu0 0.0
        %1463 = vmatprep.mubr.f32.mxu0 0.0
        %1464 = vmatmul.mubr.f32.gmra.mxu0 %v1397
        %v1465 = vpop.f32.mrf.mxu0
        %v1466 = vadd.f32 0.0, %v1465
        %v1467 = vpop.f32.mrf.mxu0
        %1468 = vdwg.mxu0
        %v1471 = vunpack.c.l.s4 1966171168
        %v1472 = vunpack.c.0.s8 %v1471
        %v1473 = vlaneseq
        %v1474 = vshrl.u32 %v1473, 7
        %v1475 = vsub.s32 %v1472, %v1474
        %v1476 = vrot.slane %v1466, %v1475
        %v1477 = vcombine.high %v1476, %v1476
        %v1479 = vunpack.c.l.s4 1966171168
        %v1480 = vunpack.c.0.s8 %v1479
        %v1481 = vlaneseq
        %v1482 = vshrl.u32 %v1481, 7
        %v1483 = vsub.s32 %v1480, %v1482
        %v1484 = vrot.slane %v1476, %v1483
        %v1486 = vunpack.c.l.s4 1966171168
        %v1487 = vunpack.c.0.s8 %v1486
        %v1488 = vlaneseq
        %v1489 = vshrl.u32 %v1488, 7
        %v1490 = vsub.s32 %v1487, %v1489
        %v1491 = vrot.slane %v1477, %v1490
        %v1492 = vcombine.high %v1484, %v1484
        %v1493 = vcombine.high %v1491, %v1491
        %1498 = vst.msk [vmem:[%s166 + $0x8] sm:$0x1] %vm353, %v1484
        %1499 = vst.msk [vmem:[%s166 + $0x18] sm:$0x1] %vm353, %v1491
        %1500 = vst.msk [vmem:[%s166 + $0x28] sm:$0x1] %vm353, %v1492
        %1501 = vst.msk [vmem:[%s166 + $0x38] sm:$0x1] %vm353, %v1493
        %v1502 = vld [vmem:[%s132 + $0x9] sm:$0x1]
        %v1503 = vld [vmem:[%s132 + $0x19] sm:$0x1]
        %v1504 = vld [vmem:[%s132 + $0x29] sm:$0x1]
        %v1505 = vld [vmem:[%s132 + $0x39] sm:$0x1]
        %v1506 = vld [vmem:[%s132 + $0xa] sm:$0x1]
        %v1507 = vld [vmem:[%s132 + $0x1a] sm:$0x1]
        %v1508 = vld [vmem:[%s132 + $0x2a] sm:$0x1]
        %v1509 = vld [vmem:[%s132 + $0x3a] sm:$0x1]
        %v1510 = vadd.f32 %v1502, %v1506
        %v1511 = vadd.f32 %v1503, %v1507
        %v1512 = vadd.f32 %v1504, %v1508
        %v1513 = vadd.f32 %v1505, %v1509
        %v1514 = vld [vmem:[%s132 + $0xb] sm:$0x1]
        %v1515 = vld [vmem:[%s132 + $0x1b] sm:$0x1]
        %v1516 = vld [vmem:[%s132 + $0x2b] sm:$0x1]
        %v1517 = vld [vmem:[%s132 + $0x3b] sm:$0x1]
        %v1518 = vadd.f32 %v1510, %v1514
        %v1519 = vadd.f32 %v1511, %v1515
        %v1520 = vadd.f32 %v1512, %v1516
        %v1521 = vadd.f32 %v1513, %v1517
        %v1522 = vld [vmem:[%s132 + $0xc] sm:$0x1]
        %v1523 = vld [vmem:[%s132 + $0x1c] sm:$0x1]
        %v1524 = vld [vmem:[%s132 + $0x2c] sm:$0x1]
        %v1525 = vld [vmem:[%s132 + $0x3c] sm:$0x1]
        %v1526 = vadd.f32 %v1518, %v1522
        %v1527 = vadd.f32 %v1519, %v1523
        %v1528 = vadd.f32 %v1520, %v1524
        %v1529 = vadd.f32 %v1521, %v1525
        %v1534 = vrot.slane %v1527, 7
        %v1535 = vsel %vm243, %v1534, %v1526
        %v1536 = vrot.slane %v1528, 6
        %v1537 = vsel %vm246, %v1536, %v1535
        %v1538 = vrot.slane %v1529, 5
        %v1539 = vsel %vm249, %v1538, %v1537
        %v1540 = vsel %vm251, %v1539, 0
        %1542 = vmatprep.subr.mxu0 0.0
        %1543 = vmatpush1.msra.mxu0 0.0
        %1544 = vmatprep.subr.mxu0 0.0
        %1545 = vmatpush1.msra.mxu0 0.0
        %1546 = vmatprep.subr.mxu0 0.0
        %1547 = vmatpush1.msra.mxu0 0.0
        %1548 = vmatprep.subr.mxu0 0.0
        %1549 = vmatpush1.msra.mxu0 0.0
        %1550 = vmatprep.subr.mxu0 0.0
        %1551 = vmatpush1.msra.mxu0 0.0
        %1552 = vmatprep.subr.mxu0 0.0
        %1553 = vmatpush1.msra.mxu0 0.0
        %1554 = vmatprep.subr.mxu0 0.0
        %1555 = vmatpush1.msra.mxu0 0.0
        %1556 = vmatprep.subr.mxu0 0.0
        %1557 = vmatpush1.msra.mxu0 0.0
        %1558 = vmatprep.subr.mxu0 0.0
        %1559 = vmatpush1.msra.mxu0 0.0
        %1560 = vmatprep.subr.mxu0 0.0
        %1561 = vmatpush1.msra.mxu0 0.0
        %1562 = vmatprep.subr.mxu0 0.0
        %1563 = vmatpush1.msra.mxu0 0.0
        %1564 = vmatprep.subr.mxu0 0.0
        %1565 = vmatpush1.msra.mxu0 0.0
        %1566 = vmatprep.subr.mxu0 0.0
        %1567 = vmatpush1.msra.mxu0 0.0
        %1568 = vmatprep.subr.mxu0 0.0
        %1569 = vmatpush1.msra.mxu0 0.0
        %1570 = vmatprep.subr.mxu0 0.0
        %1571 = vmatpush1.msra.mxu0 %v209
        %1572 = vmatprep.subr.mxu0 0.0
        %1573 = vmatpush1.msra.mxu0 %v208
        %1574 = vmatprep.subr.mxu0 0.0
        %1575 = vmatpush2.msra.mxu0 0.0
        %1576 = vmatprep.subr.mxu0 0.0
        %1577 = vmatpush2.msra.mxu0 0.0
        %1578 = vmatprep.subr.mxu0 0.0
        %1579 = vmatpush2.msra.mxu0 0.0
        %1580 = vmatprep.subr.mxu0 0.0
        %1581 = vmatpush2.msra.mxu0 0.0
        %1582 = vmatprep.subr.mxu0 0.0
        %1583 = vmatpush2.msra.mxu0 0.0
        %1584 = vmatprep.subr.mxu0 0.0
        %1585 = vmatpush2.msra.mxu0 0.0
        %1586 = vmatprep.subr.mxu0 0.0
        %1587 = vmatpush2.msra.mxu0 0.0
        %1588 = vmatprep.subr.mxu0 0.0
        %1589 = vmatpush2.msra.mxu0 0.0
        %1590 = vmatprep.subr.mxu0 0.0
        %1591 = vmatpush2.msra.mxu0 0.0
        %1592 = vmatprep.subr.mxu0 0.0
        %1593 = vmatpush2.msra.mxu0 0.0
        %1594 = vmatprep.subr.mxu0 0.0
        %1595 = vmatpush2.msra.mxu0 0.0
        %1596 = vmatprep.subr.mxu0 0.0
        %1597 = vmatpush2.msra.mxu0 0.0
        %1598 = vmatprep.subr.mxu0 0.0
        %1599 = vmatpush2.msra.mxu0 0.0
        %1600 = vmatprep.subr.mxu0 0.0
        %1601 = vmatpush2.msra.mxu0 0.0
        %1602 = vmatprep.subr.mxu0 0.0
        %1603 = vmatpush2.msra.mxu0 0.0
        %1604 = vmatprep.subr.mxu0 0.0
        %1605 = vmatpush2.msra.mxu0 0.0
        %1606 = vmatprep.mubr.f32.mxu0 0.0
        %1607 = vmatmul.mubr.f32.gmra.mxu0 %v1540
        %v1608 = vpop.f32.mrf.mxu0
        %v1609 = vadd.f32 0.0, %v1608
        %v1610 = vpop.f32.mrf.mxu0
        %1611 = vdwg.mxu0
        %v1614 = vunpack.c.l.s4 1966171168
        %v1615 = vunpack.c.0.s8 %v1614
        %v1616 = vlaneseq
        %v1617 = vshrl.u32 %v1616, 7
        %v1618 = vsub.s32 %v1615, %v1617
        %v1619 = vrot.slane %v1609, %v1618
        %v1620 = vcombine.high %v1619, %v1619
        %v1622 = vunpack.c.l.s4 1966171168
        %v1623 = vunpack.c.0.s8 %v1622
        %v1624 = vlaneseq
        %v1625 = vshrl.u32 %v1624, 7
        %v1626 = vsub.s32 %v1623, %v1625
        %v1627 = vrot.slane %v1619, %v1626
        %v1629 = vunpack.c.l.s4 1966171168
        %v1630 = vunpack.c.0.s8 %v1629
        %v1631 = vlaneseq
        %v1632 = vshrl.u32 %v1631, 7
        %v1633 = vsub.s32 %v1630, %v1632
        %v1634 = vrot.slane %v1620, %v1633
        %v1635 = vcombine.high %v1627, %v1627
        %v1636 = vcombine.high %v1634, %v1634
        %1641 = vst.msk [vmem:[%s166 + $0x9] sm:$0x1] %vm353, %v1627
        %1642 = vst.msk [vmem:[%s166 + $0x19] sm:$0x1] %vm353, %v1634
        %1643 = vst.msk [vmem:[%s166 + $0x29] sm:$0x1] %vm353, %v1635
        %1644 = vst.msk [vmem:[%s166 + $0x39] sm:$0x1] %vm353, %v1636
        %v1645 = vld [vmem:[%s132 + $0xa] sm:$0x1]
        %v1646 = vld [vmem:[%s132 + $0x1a] sm:$0x1]
        %v1647 = vld [vmem:[%s132 + $0x2a] sm:$0x1]
        %v1648 = vld [vmem:[%s132 + $0x3a] sm:$0x1]
        %v1649 = vld [vmem:[%s132 + $0xb] sm:$0x1]
        %v1650 = vld [vmem:[%s132 + $0x1b] sm:$0x1]
        %v1651 = vld [vmem:[%s132 + $0x2b] sm:$0x1]
        %v1652 = vld [vmem:[%s132 + $0x3b] sm:$0x1]
        %v1653 = vadd.f32 %v1645, %v1649
        %v1654 = vadd.f32 %v1646, %v1650
        %v1655 = vadd.f32 %v1647, %v1651
        %v1656 = vadd.f32 %v1648, %v1652
        %v1657 = vld [vmem:[%s132 + $0xc] sm:$0x1]
        %v1658 = vld [vmem:[%s132 + $0x1c] sm:$0x1]
        %v1659 = vld [vmem:[%s132 + $0x2c] sm:$0x1]
        %v1660 = vld [vmem:[%s132 + $0x3c] sm:$0x1]
        %v1661 = vadd.f32 %v1653, %v1657
        %v1662 = vadd.f32 %v1654, %v1658
        %v1663 = vadd.f32 %v1655, %v1659
        %v1664 = vadd.f32 %v1656, %v1660
        %v1665 = vld [vmem:[%s132 + $0xd] sm:$0x1]
        %v1666 = vld [vmem:[%s132 + $0x1d] sm:$0x1]
        %v1667 = vld [vmem:[%s132 + $0x2d] sm:$0x1]
        %v1668 = vld [vmem:[%s132 + $0x3d] sm:$0x1]
        %v1669 = vadd.f32 %v1661, %v1665
        %v1670 = vadd.f32 %v1662, %v1666
        %v1671 = vadd.f32 %v1663, %v1667
        %v1672 = vadd.f32 %v1664, %v1668
        %v1677 = vrot.slane %v1670, 7
        %v1678 = vsel %vm243, %v1677, %v1669
        %v1679 = vrot.slane %v1671, 6
        %v1680 = vsel %vm246, %v1679, %v1678
        %v1681 = vrot.slane %v1672, 5
        %v1682 = vsel %vm249, %v1681, %v1680
        %v1683 = vsel %vm251, %v1682, 0
        %1685 = vmatprep.subr.mxu0 0.0
        %1686 = vmatpush1.msra.mxu0 0.0
        %1687 = vmatprep.subr.mxu0 0.0
        %1688 = vmatpush1.msra.mxu0 0.0
        %1689 = vmatprep.subr.mxu0 0.0
        %1690 = vmatpush1.msra.mxu0 0.0
        %1691 = vmatprep.subr.mxu0 0.0
        %1692 = vmatpush1.msra.mxu0 0.0
        %1693 = vmatprep.subr.mxu0 0.0
        %1694 = vmatpush1.msra.mxu0 0.0
        %1695 = vmatprep.subr.mxu0 0.0
        %1696 = vmatpush1.msra.mxu0 0.0
        %1697 = vmatprep.subr.mxu0 0.0
        %1698 = vmatpush1.msra.mxu0 0.0
        %1699 = vmatprep.subr.mxu0 0.0
        %1700 = vmatpush1.msra.mxu0 0.0
        %1701 = vmatprep.subr.mxu0 0.0
        %1702 = vmatpush1.msra.mxu0 0.0
        %1703 = vmatprep.subr.mxu0 0.0
        %1704 = vmatpush1.msra.mxu0 0.0
        %1705 = vmatprep.subr.mxu0 0.0
        %1706 = vmatpush1.msra.mxu0 0.0
        %1707 = vmatprep.subr.mxu0 0.0
        %1708 = vmatpush1.msra.mxu0 0.0
        %1709 = vmatprep.subr.mxu0 0.0
        %1710 = vmatpush1.msra.mxu0 0.0
        %1711 = vmatprep.subr.mxu0 0.0
        %1712 = vmatpush1.msra.mxu0 0.0
        %1713 = vmatprep.subr.mxu0 0.0
        %1714 = vmatpush1.msra.mxu0 %v209
        %1715 = vmatprep.subr.mxu0 0.0
        %1716 = vmatpush1.msra.mxu0 %v208
        %1717 = vmatprep.subr.mxu0 0.0
        %1718 = vmatpush2.msra.mxu0 0.0
        %1719 = vmatprep.subr.mxu0 0.0
        %1720 = vmatpush2.msra.mxu0 0.0
        %1721 = vmatprep.subr.mxu0 0.0
        %1722 = vmatpush2.msra.mxu0 0.0
        %1723 = vmatprep.subr.mxu0 0.0
        %1724 = vmatpush2.msra.mxu0 0.0
        %1725 = vmatprep.subr.mxu0 0.0
        %1726 = vmatpush2.msra.mxu0 0.0
        %1727 = vmatprep.subr.mxu0 0.0
        %1728 = vmatpush2.msra.mxu0 0.0
        %1729 = vmatprep.subr.mxu0 0.0
        %1730 = vmatpush2.msra.mxu0 0.0
        %1731 = vmatprep.subr.mxu0 0.0
        %1732 = vmatpush2.msra.mxu0 0.0
        %1733 = vmatprep.subr.mxu0 0.0
        %1734 = vmatpush2.msra.mxu0 0.0
        %1735 = vmatprep.subr.mxu0 0.0
        %1736 = vmatpush2.msra.mxu0 0.0
        %1737 = vmatprep.subr.mxu0 0.0
        %1738 = vmatpush2.msra.mxu0 0.0
        %1739 = vmatprep.subr.mxu0 0.0
        %1740 = vmatpush2.msra.mxu0 0.0
        %1741 = vmatprep.subr.mxu0 0.0
        %1742 = vmatpush2.msra.mxu0 0.0
        %1743 = vmatprep.subr.mxu0 0.0
        %1744 = vmatpush2.msra.mxu0 0.0
        %1745 = vmatprep.subr.mxu0 0.0
        %1746 = vmatpush2.msra.mxu0 0.0
        %1747 = vmatprep.subr.mxu0 0.0
        %1748 = vmatpush2.msra.mxu0 0.0
        %1749 = vmatprep.mubr.f32.mxu0 0.0
        %1750 = vmatmul.mubr.f32.gmra.mxu0 %v1683
        %v1751 = vpop.f32.mrf.mxu0
        %v1752 = vadd.f32 0.0, %v1751
        %v1753 = vpop.f32.mrf.mxu0
        %1754 = vdwg.mxu0
        %v1757 = vunpack.c.l.s4 1966171168
        %v1758 = vunpack.c.0.s8 %v1757
        %v1759 = vlaneseq
        %v1760 = vshrl.u32 %v1759, 7
        %v1761 = vsub.s32 %v1758, %v1760
        %v1762 = vrot.slane %v1752, %v1761
        %v1763 = vcombine.high %v1762, %v1762
        %v1765 = vunpack.c.l.s4 1966171168
        %v1766 = vunpack.c.0.s8 %v1765
        %v1767 = vlaneseq
        %v1768 = vshrl.u32 %v1767, 7
        %v1769 = vsub.s32 %v1766, %v1768
        %v1770 = vrot.slane %v1762, %v1769
        %v1772 = vunpack.c.l.s4 1966171168
        %v1773 = vunpack.c.0.s8 %v1772
        %v1774 = vlaneseq
        %v1775 = vshrl.u32 %v1774, 7
        %v1776 = vsub.s32 %v1773, %v1775
        %v1777 = vrot.slane %v1763, %v1776
        %v1778 = vcombine.high %v1770, %v1770
        %v1779 = vcombine.high %v1777, %v1777
        %1784 = vst.msk [vmem:[%s166 + $0xa] sm:$0x1] %vm353, %v1770
        %1785 = vst.msk [vmem:[%s166 + $0x1a] sm:$0x1] %vm353, %v1777
        %1786 = vst.msk [vmem:[%s166 + $0x2a] sm:$0x1] %vm353, %v1778
        %1787 = vst.msk [vmem:[%s166 + $0x3a] sm:$0x1] %vm353, %v1779
        %v1788 = vld [vmem:[%s132 + $0xb] sm:$0x1]
        %v1789 = vld [vmem:[%s132 + $0x1b] sm:$0x1]
        %v1790 = vld [vmem:[%s132 + $0x2b] sm:$0x1]
        %v1791 = vld [vmem:[%s132 + $0x3b] sm:$0x1]
        %v1792 = vld [vmem:[%s132 + $0xc] sm:$0x1]
        %v1793 = vld [vmem:[%s132 + $0x1c] sm:$0x1]
        %v1794 = vld [vmem:[%s132 + $0x2c] sm:$0x1]
        %v1795 = vld [vmem:[%s132 + $0x3c] sm:$0x1]
        %v1796 = vadd.f32 %v1788, %v1792
        %v1797 = vadd.f32 %v1789, %v1793
        %v1798 = vadd.f32 %v1790, %v1794
        %v1799 = vadd.f32 %v1791, %v1795
        %v1800 = vld [vmem:[%s132 + $0xd] sm:$0x1]
        %v1801 = vld [vmem:[%s132 + $0x1d] sm:$0x1]
        %v1802 = vld [vmem:[%s132 + $0x2d] sm:$0x1]
        %v1803 = vld [vmem:[%s132 + $0x3d] sm:$0x1]
        %v1804 = vadd.f32 %v1796, %v1800
        %v1805 = vadd.f32 %v1797, %v1801
        %v1806 = vadd.f32 %v1798, %v1802
        %v1807 = vadd.f32 %v1799, %v1803
        %v1808 = vld [vmem:[%s132 + $0xe] sm:$0x1]
        %v1809 = vld [vmem:[%s132 + $0x1e] sm:$0x1]
        %v1810 = vld [vmem:[%s132 + $0x2e] sm:$0x1]
        %v1811 = vld [vmem:[%s132 + $0x3e] sm:$0x1]
        %v1812 = vadd.f32 %v1804, %v1808
        %v1813 = vadd.f32 %v1805, %v1809
        %v1814 = vadd.f32 %v1806, %v1810
        %v1815 = vadd.f32 %v1807, %v1811
        %v1820 = vrot.slane %v1813, 7
        %v1821 = vsel %vm243, %v1820, %v1812
        %v1822 = vrot.slane %v1814, 6
        %v1823 = vsel %vm246, %v1822, %v1821
        %v1824 = vrot.slane %v1815, 5
        %v1825 = vsel %vm249, %v1824, %v1823
        %v1826 = vsel %vm251, %v1825, 0
        %1828 = vmatprep.subr.mxu0 0.0
        %1829 = vmatpush1.msra.mxu0 0.0
        %1830 = vmatprep.subr.mxu0 0.0
        %1831 = vmatpush1.msra.mxu0 0.0
        %1832 = vmatprep.subr.mxu0 0.0
        %1833 = vmatpush1.msra.mxu0 0.0
        %1834 = vmatprep.subr.mxu0 0.0
        %1835 = vmatpush1.msra.mxu0 0.0
        %1836 = vmatprep.subr.mxu0 0.0
        %1837 = vmatpush1.msra.mxu0 0.0
        %1838 = vmatprep.subr.mxu0 0.0
        %1839 = vmatpush1.msra.mxu0 0.0
        %1840 = vmatprep.subr.mxu0 0.0
        %1841 = vmatpush1.msra.mxu0 0.0
        %1842 = vmatprep.subr.mxu0 0.0
        %1843 = vmatpush1.msra.mxu0 0.0
        %1844 = vmatprep.subr.mxu0 0.0
        %1845 = vmatpush1.msra.mxu0 0.0
        %1846 = vmatprep.subr.mxu0 0.0
        %1847 = vmatpush1.msra.mxu0 0.0
        %1848 = vmatprep.subr.mxu0 0.0
        %1849 = vmatpush1.msra.mxu0 0.0
        %1850 = vmatprep.subr.mxu0 0.0
        %1851 = vmatpush1.msra.mxu0 0.0
        %1852 = vmatprep.subr.mxu0 0.0
        %1853 = vmatpush1.msra.mxu0 0.0
        %1854 = vmatprep.subr.mxu0 0.0
        %1855 = vmatpush1.msra.mxu0 0.0
        %1856 = vmatprep.subr.mxu0 0.0
        %1857 = vmatpush1.msra.mxu0 %v209
        %1858 = vmatprep.subr.mxu0 0.0
        %1859 = vmatpush1.msra.mxu0 %v208
        %1860 = vmatprep.subr.mxu0 0.0
        %1861 = vmatpush2.msra.mxu0 0.0
        %1862 = vmatprep.subr.mxu0 0.0
        %1863 = vmatpush2.msra.mxu0 0.0
        %1864 = vmatprep.subr.mxu0 0.0
        %1865 = vmatpush2.msra.mxu0 0.0
        %1866 = vmatprep.subr.mxu0 0.0
        %1867 = vmatpush2.msra.mxu0 0.0
        %1868 = vmatprep.subr.mxu0 0.0
        %1869 = vmatpush2.msra.mxu0 0.0
        %1870 = vmatprep.subr.mxu0 0.0
        %1871 = vmatpush2.msra.mxu0 0.0
        %1872 = vmatprep.subr.mxu0 0.0
        %1873 = vmatpush2.msra.mxu0 0.0
        %1874 = vmatprep.subr.mxu0 0.0
        %1875 = vmatpush2.msra.mxu0 0.0
        %1876 = vmatprep.subr.mxu0 0.0
        %1877 = vmatpush2.msra.mxu0 0.0
        %1878 = vmatprep.subr.mxu0 0.0
        %1879 = vmatpush2.msra.mxu0 0.0
        %1880 = vmatprep.subr.mxu0 0.0
        %1881 = vmatpush2.msra.mxu0 0.0
        %1882 = vmatprep.subr.mxu0 0.0
        %1883 = vmatpush2.msra.mxu0 0.0
        %1884 = vmatprep.subr.mxu0 0.0
        %1885 = vmatpush2.msra.mxu0 0.0
        %1886 = vmatprep.subr.mxu0 0.0
        %1887 = vmatpush2.msra.mxu0 0.0
        %1888 = vmatprep.subr.mxu0 0.0
        %1889 = vmatpush2.msra.mxu0 0.0
        %1890 = vmatprep.subr.mxu0 0.0
        %1891 = vmatpush2.msra.mxu0 0.0
        %1892 = vmatprep.mubr.f32.mxu0 0.0
        %1893 = vmatmul.mubr.f32.gmra.mxu0 %v1826
        %v1894 = vpop.f32.mrf.mxu0
        %v1895 = vadd.f32 0.0, %v1894
        %v1896 = vpop.f32.mrf.mxu0
        %1897 = vdwg.mxu0
        %v1900 = vunpack.c.l.s4 1966171168
        %v1901 = vunpack.c.0.s8 %v1900
        %v1902 = vlaneseq
        %v1903 = vshrl.u32 %v1902, 7
        %v1904 = vsub.s32 %v1901, %v1903
        %v1905 = vrot.slane %v1895, %v1904
        %v1906 = vcombine.high %v1905, %v1905
        %v1908 = vunpack.c.l.s4 1966171168
        %v1909 = vunpack.c.0.s8 %v1908
        %v1910 = vlaneseq
        %v1911 = vshrl.u32 %v1910, 7
        %v1912 = vsub.s32 %v1909, %v1911
        %v1913 = vrot.slane %v1905, %v1912
        %v1915 = vunpack.c.l.s4 1966171168
        %v1916 = vunpack.c.0.s8 %v1915
        %v1917 = vlaneseq
        %v1918 = vshrl.u32 %v1917, 7
        %v1919 = vsub.s32 %v1916, %v1918
        %v1920 = vrot.slane %v1906, %v1919
        %v1921 = vcombine.high %v1913, %v1913
        %v1922 = vcombine.high %v1920, %v1920
        %1927 = vst.msk [vmem:[%s166 + $0xb] sm:$0x1] %vm353, %v1913
        %1928 = vst.msk [vmem:[%s166 + $0x1b] sm:$0x1] %vm353, %v1920
        %1929 = vst.msk [vmem:[%s166 + $0x2b] sm:$0x1] %vm353, %v1921
        %1930 = vst.msk [vmem:[%s166 + $0x3b] sm:$0x1] %vm353, %v1922
        %v1931 = vld [vmem:[%s132 + $0xc] sm:$0x1]
        %v1932 = vld [vmem:[%s132 + $0x1c] sm:$0x1]
        %v1933 = vld [vmem:[%s132 + $0x2c] sm:$0x1]
        %v1934 = vld [vmem:[%s132 + $0x3c] sm:$0x1]
        %v1935 = vld [vmem:[%s132 + $0xd] sm:$0x1]
        %v1936 = vld [vmem:[%s132 + $0x1d] sm:$0x1]
        %v1937 = vld [vmem:[%s132 + $0x2d] sm:$0x1]
        %v1938 = vld [vmem:[%s132 + $0x3d] sm:$0x1]
        %v1939 = vadd.f32 %v1931, %v1935
        %v1940 = vadd.f32 %v1932, %v1936
        %v1941 = vadd.f32 %v1933, %v1937
        %v1942 = vadd.f32 %v1934, %v1938
        %v1943 = vld [vmem:[%s132 + $0xe] sm:$0x1]
        %v1944 = vld [vmem:[%s132 + $0x1e] sm:$0x1]
        %v1945 = vld [vmem:[%s132 + $0x2e] sm:$0x1]
        %v1946 = vld [vmem:[%s132 + $0x3e] sm:$0x1]
        %v1947 = vadd.f32 %v1939, %v1943
        %v1948 = vadd.f32 %v1940, %v1944
        %v1949 = vadd.f32 %v1941, %v1945
        %v1950 = vadd.f32 %v1942, %v1946
        %v1951 = vld [vmem:[%s132 + $0xf] sm:$0x1]
        %v1952 = vld [vmem:[%s132 + $0x1f] sm:$0x1]
        %v1953 = vld [vmem:[%s132 + $0x2f] sm:$0x1]
        %v1954 = vld [vmem:[%s132 + $0x3f] sm:$0x1]
        %v1955 = vadd.f32 %v1947, %v1951
        %v1956 = vadd.f32 %v1948, %v1952
        %v1957 = vadd.f32 %v1949, %v1953
        %v1958 = vadd.f32 %v1950, %v1954
        %v1963 = vrot.slane %v1956, 7
        %v1964 = vsel %vm243, %v1963, %v1955
        %v1965 = vrot.slane %v1957, 6
        %v1966 = vsel %vm246, %v1965, %v1964
        %v1967 = vrot.slane %v1958, 5
        %v1968 = vsel %vm249, %v1967, %v1966
        %v1969 = vsel %vm251, %v1968, 0
        %1971 = vmatprep.subr.mxu0 0.0
        %1972 = vmatpush1.msra.mxu0 0.0
        %1973 = vmatprep.subr.mxu0 0.0
        %1974 = vmatpush1.msra.mxu0 0.0
        %1975 = vmatprep.subr.mxu0 0.0
        %1976 = vmatpush1.msra.mxu0 0.0
        %1977 = vmatprep.subr.mxu0 0.0
        %1978 = vmatpush1.msra.mxu0 0.0
        %1979 = vmatprep.subr.mxu0 0.0
        %1980 = vmatpush1.msra.mxu0 0.0
        %1981 = vmatprep.subr.mxu0 0.0
        %1982 = vmatpush1.msra.mxu0 0.0
        %1983 = vmatprep.subr.mxu0 0.0
        %1984 = vmatpush1.msra.mxu0 0.0
        %1985 = vmatprep.subr.mxu0 0.0
        %1986 = vmatpush1.msra.mxu0 0.0
        %1987 = vmatprep.subr.mxu0 0.0
        %1988 = vmatpush1.msra.mxu0 0.0
        %1989 = vmatprep.subr.mxu0 0.0
        %1990 = vmatpush1.msra.mxu0 0.0
        %1991 = vmatprep.subr.mxu0 0.0
        %1992 = vmatpush1.msra.mxu0 0.0
        %1993 = vmatprep.subr.mxu0 0.0
        %1994 = vmatpush1.msra.mxu0 0.0
        %1995 = vmatprep.subr.mxu0 0.0
        %1996 = vmatpush1.msra.mxu0 0.0
        %1997 = vmatprep.subr.mxu0 0.0
        %1998 = vmatpush1.msra.mxu0 0.0
        %1999 = vmatprep.subr.mxu0 0.0
        %2000 = vmatpush1.msra.mxu0 %v209
        %2001 = vmatprep.subr.mxu0 0.0
        %2002 = vmatpush1.msra.mxu0 %v208
        %2003 = vmatprep.subr.mxu0 0.0
        %2004 = vmatpush2.msra.mxu0 0.0
        %2005 = vmatprep.subr.mxu0 0.0
        %2006 = vmatpush2.msra.mxu0 0.0
        %2007 = vmatprep.subr.mxu0 0.0
        %2008 = vmatpush2.msra.mxu0 0.0
        %2009 = vmatprep.subr.mxu0 0.0
        %2010 = vmatpush2.msra.mxu0 0.0
        %2011 = vmatprep.subr.mxu0 0.0
        %2012 = vmatpush2.msra.mxu0 0.0
        %2013 = vmatprep.subr.mxu0 0.0
        %2014 = vmatpush2.msra.mxu0 0.0
        %2015 = vmatprep.subr.mxu0 0.0
        %2016 = vmatpush2.msra.mxu0 0.0
        %2017 = vmatprep.subr.mxu0 0.0
        %2018 = vmatpush2.msra.mxu0 0.0
        %2019 = vmatprep.subr.mxu0 0.0
        %2020 = vmatpush2.msra.mxu0 0.0
        %2021 = vmatprep.subr.mxu0 0.0
        %2022 = vmatpush2.msra.mxu0 0.0
        %2023 = vmatprep.subr.mxu0 0.0
        %2024 = vmatpush2.msra.mxu0 0.0
        %2025 = vmatprep.subr.mxu0 0.0
        %2026 = vmatpush2.msra.mxu0 0.0
        %2027 = vmatprep.subr.mxu0 0.0
        %2028 = vmatpush2.msra.mxu0 0.0
        %2029 = vmatprep.subr.mxu0 0.0
        %2030 = vmatpush2.msra.mxu0 0.0
        %2031 = vmatprep.subr.mxu0 0.0
        %2032 = vmatpush2.msra.mxu0 0.0
        %2033 = vmatprep.subr.mxu0 0.0
        %2034 = vmatpush2.msra.mxu0 0.0
        %2035 = vmatprep.mubr.f32.mxu0 0.0
        %2036 = vmatmul.mubr.f32.gmra.mxu0 %v1969
        %v2037 = vpop.f32.mrf.mxu0
        %v2038 = vadd.f32 0.0, %v2037
        %v2039 = vpop.f32.mrf.mxu0
        %2040 = vdwg.mxu0
        %v2043 = vunpack.c.l.s4 1966171168
        %v2044 = vunpack.c.0.s8 %v2043
        %v2045 = vlaneseq
        %v2046 = vshrl.u32 %v2045, 7
        %v2047 = vsub.s32 %v2044, %v2046
        %v2048 = vrot.slane %v2038, %v2047
        %v2049 = vcombine.high %v2048, %v2048
        %v2051 = vunpack.c.l.s4 1966171168
        %v2052 = vunpack.c.0.s8 %v2051
        %v2053 = vlaneseq
        %v2054 = vshrl.u32 %v2053, 7
        %v2055 = vsub.s32 %v2052, %v2054
        %v2056 = vrot.slane %v2048, %v2055
        %v2058 = vunpack.c.l.s4 1966171168
        %v2059 = vunpack.c.0.s8 %v2058
        %v2060 = vlaneseq
        %v2061 = vshrl.u32 %v2060, 7
        %v2062 = vsub.s32 %v2059, %v2061
        %v2063 = vrot.slane %v2049, %v2062
        %v2064 = vcombine.high %v2056, %v2056
        %v2065 = vcombine.high %v2063, %v2063
        %2070 = vst.msk [vmem:[%s166 + $0xc] sm:$0x1] %vm353, %v2056
        %2071 = vst.msk [vmem:[%s166 + $0x1c] sm:$0x1] %vm353, %v2063
        %2072 = vst.msk [vmem:[%s166 + $0x2c] sm:$0x1] %vm353, %v2064
        %2073 = vst.msk [vmem:[%s166 + $0x3c] sm:$0x1] %vm353, %v2065
        %s2074 = smul.u32 4, %s20
        %p2075 = scmp.lt.s32.totalorder %s19, 1
        %s2076 = scalar_select %p2075, %s19, 1
        %p2077 = scmp.lt.s32.totalorder %s2074, 3
        %s2078 = scalar_select %p2077, %s2074, 3
        %s2079 = smul.addr %s2078, 2
        %s2080 = smul.addr %s2076, 8
        %s2081 = sadd.s32 %s2079, %s2080
        %s2082 = smul.addr %s2081, 8
        %s2083 = scalar_lea.vmem %s1, %s2082
        // Predicated region
        $region29: #{tpu_custom_call.1} parent=23 // pred_check
          %p2084 = pneg %p75
        $region30: #{tpu_custom_call.1} parent=23 // pred_check_branch
          %2086 = sbr.rel (%p2084) target = $region32
        $region31: #{tpu_custom_call.1} parent=23 // pred_region
          %s2087 = smul.u32 4, %s20
        $region32: #{tpu_custom_call.1} parent=23 // pred_fallthru
          _
      $region24: #{tpu_custom_call.1} parent=5 // pred_fallthru
        _
      %p2088 = scmp.le.s32.totalorder 2, %s10
      // Predicated region
      $region33: #{tpu_custom_call.1} parent=5 // pred_check
        %p2089 = pneg %p2088
      $region34: #{tpu_custom_call.1} parent=5 // pred_check_branch
        %2091 = sbr.rel (%p2089) target = $region36
      $region35: #{tpu_custom_call.1} parent=5 // pred_region
        %s2092 = ssub.s32 %s10, 2
        // Predicated region
        $region37: #{tpu_custom_call.1} parent=35 // pred_check
          %p2093 = pneg %p81
        $region38: #{tpu_custom_call.1} parent=35 // pred_check_branch
          %2095 = sbr.rel (%p2093) target = $region40
        $region39: #{tpu_custom_call.1} parent=35 // pred_region
          %s2096 = smul.u32 4, %s22
          %p2097 = scmp.lt.s32.totalorder %s21, 1
          %s2098 = scalar_select %p2097, %s21, 1
          %p2099 = scmp.lt.s32.totalorder %s2096, 3
          %s2100 = scalar_select %p2099, %s2096, 3
          %s2101 = smul.addr %s2100, 2
          %s2102 = smul.addr %s2098, 8
          %s2103 = sadd.s32 %s2101, %s2102
          %s2104 = smul.addr %s2103, 8
          %s2105 = scalar_lea.vmem %s1, %s2104
        $region40: #{tpu_custom_call.1} parent=35 // pred_fallthru
          _
      $region36: #{tpu_custom_call.1} parent=5 // pred_fallthru
        _
    $region6: #{tpu_custom_call.1} parent=1 // loop_footer
      %s14 = sadd.s32 1, %s10
    $region7: #{tpu_custom_call.1} parent=1 // loop_footer_branch
      %9 = sbr.rel target = $region3
    $region8: #{tpu_custom_call.1} parent=1 // loop_exit
      _
    %2106 = vsyncpa [#allocation3], 1
    %s2107 = scalar_lea.sflag [#allocation3], 1
    %2108 = vsyncpa %s2107, 1

</llo_original>
